<compile_context>
chip_gen: v7x
topology: tpu7x:2x2x1
jax: 0.10.0
libtpu: 0.0.40
codegen_flags: <defaults>
</compile_context>

<pallas_src>
import math
import jax
import jax.numpy as jnp
from jax import lax
from jax.experimental import pallas as pl
from jax.experimental.pallas import tpu as pltpu


def _bmm(w, act):
    """(Do, Di) weight x (BB, Di, Lc) activation -> (BB, Do, Lc), f32 accum."""
    bb = act.shape[0]
    wb = jnp.broadcast_to(w[None], (bb,) + w.shape)
    return lax.dot_general(wb, act, (((2,), (1,)), ((0,), (0,))),
                           preferred_element_type=jnp.float32)


def ssm_kernel(x_ref,                       # (BB, H, Lc)   bf16 (time on lanes)
               win_re_ref, win_im_ref,      # (N, H)        bf16  gamma*B
               lam_re_ref, lam_im_ref,      # (N, 1)        f32
               wz_re_ref, wz_im_ref,        # (Hm, N)       bf16  W1@(2C_re), W1@(-2C_im)
               wz_x_ref, b1_ref,            # (Hm, H) bf16, (Hm, 1) f32  W1@D, b1
               w2_ref, b2_ref,              # (Hm, Hm) bf16, (Hm, 1) f32
               w3_ref, wl_ref, blast_ref,   # (Os, Hm), (Os, H) bf16, (Os, 1) f32
               o_ref,                       # (BB, Os, Lc)  f32
               carry_re, carry_im):         # VMEM scratch (BB, N, 1) f32
    Lc = x_ref.shape[2]

    # reset the cross-chunk hidden-state carry at the start of every sequence
    @pl.when(pl.program_id(1) == 0)
    def _():
        carry_re[...] = jnp.zeros_like(carry_re)
        carry_im[...] = jnp.zeros_like(carry_im)

    x_bf = x_ref[...]                                        # (BB, H, Lc) bf16

    # input projection with gamma folded in: g = gamma * (B @ u), time on lanes
    s_re = _bmm(win_re_ref[...], x_bf)                       # (BB, N, Lc) f32
    s_im = _bmm(win_im_ref[...], x_bf)

    lam_re = lam_re_ref[...][None]                           # (1, N, 1)
    lam_im = lam_im_ref[...][None]
    t_idx = lax.broadcasted_iota(jnp.int32, (1, 1, Lc), 2)   # (1, 1, Lc)

    # inject the carried hidden state into the scan input at t=0:
    #   g'[0] = g[0] + Lambda * h_carry   (algebraically identical recurrence)
    c_re = carry_re[...]                                     # (BB, N, 1)
    c_im = carry_im[...]
    inj_re = lam_re * c_re - lam_im * c_im
    inj_im = lam_re * c_im + lam_im * c_re
    first = (t_idx == 0).astype(jnp.float32)
    s_re = s_re + inj_re * first
    s_im = s_im + inj_im * first

    # log-depth inclusive scan of h[t] = Lambda*h[t-1] + g'[t] along the lane
    # axis.  Lambda is time-invariant, so level k only needs Lambda^(2^k); the
    # shift is an XLU roll + mask (no concatenate copies on the vst slot),
    # complex arithmetic carried as separate re/im planes in f32.
    p_re, p_im = lam_re, lam_im
    d = 1
    while d < Lc:
        keep = t_idx >= d
        sh_re = jnp.where(keep, pltpu.roll(s_re, shift=d, axis=2), 0.0)
        sh_im = jnp.where(keep, pltpu.roll(s_im, shift=d, axis=2), 0.0)
        s_re, s_im = (s_re + p_re * sh_re - p_im * sh_im,
                      s_im + p_re * sh_im + p_im * sh_re)
        p_re, p_im = p_re * p_re - p_im * p_im, 2.0 * p_re * p_im
        d *= 2

    # carry the last timestep's state into the next sequence chunk
    carry_re[...] = s_re[:, :, Lc - 1:Lc]
    carry_im[...] = s_im[:, :, Lc - 1:Lc]

    h_re = s_re.astype(jnp.bfloat16)
    h_im = s_im.astype(jnp.bfloat16)

    # LRU output projection fused with the first MLP Linear (both linear):
    #   z = W1 @ (2*Re(C h) + D u) + b1   -- accumulated lane-aligned dots
    z = (_bmm(wz_re_ref[...], h_re) + _bmm(wz_im_ref[...], h_im)
         + _bmm(wz_x_ref[...], x_bf) + b1_ref[...][None])
    z = z * jax.nn.sigmoid(z)                                # SiLU
    z = _bmm(w2_ref[...], z.astype(jnp.bfloat16)) + b2_ref[...][None]
    z = jnp.maximum(z, 0.0)                                  # ReLU
    # last MLP Linear accumulated with the residual Linear (no concatenation)
    out = (_bmm(w3_ref[...], z.astype(jnp.bfloat16))
           + _bmm(wl_ref[...], x_bf) + blast_ref[...][None])
    o_ref[...] = out


def _round_up(v, m):
    return (v + m - 1) // m * m


def ssm_forward(x, P, *, batch_block=None, seq_block=None):
    """Fused SSM forward.  x: (B, L, H) float32 -> (B, L, O) float32."""
    B, L, H = x.shape
    O, N = P["C_re"].shape
    Hm = P["W1"].shape[0]
    f32, bf16 = jnp.float32, jnp.bfloat16

    # channel (sublane) dims rounded to 8; time chunk is a multiple of 128 so
    # the lane axis of every in-kernel tensor is fully dense.
    Np = _round_up(N, 8)
    Hmp = _round_up(Hm, 8)
    Os = _round_up(O, 8)
    if seq_block is None:
        Lc = 128
    else:
        Lc = max(128, _round_up(min(max(seq_block, 1), max(L, 1)), 128))
    L_pad = _round_up(L, Lc)

    # ---- weights: packed / fused once, outside the kernel ----------------
    gamma_c = P["gamma"].reshape(N, 1)
    lam_re = jnp.pad(P["lam_re"].reshape(N, 1), ((0, Np - N), (0, 0)))
    lam_im = jnp.pad(P["lam_im"].reshape(N, 1), ((0, Np - N), (0, 0)))
    win_re = jnp.pad(P["B_re"] * gamma_c, ((0, Np - N), (0, 0))).astype(bf16)
    win_im = jnp.pad(P["B_im"] * gamma_c, ((0, Np - N), (0, 0))).astype(bf16)

    # first MLP Linear fused into the LRU output projection (precomputed f32).
    # (For very large Hm relative to O this fusion trades extra MXU FLOPs for
    #  one fewer serialized matmul; at typical SSM sizes it is a net win.)
    W1 = P["W1"]
    wz_re = jnp.pad(W1 @ (2.0 * P["C_re"]),
                    ((0, Hmp - Hm), (0, Np - N))).astype(bf16)
    wz_im = jnp.pad(W1 @ (-2.0 * P["C_im"]),
                    ((0, Hmp - Hm), (0, Np - N))).astype(bf16)
    wz_x = jnp.pad(W1 @ P["D"], ((0, Hmp - Hm), (0, 0))).astype(bf16)
    b1 = jnp.pad(P["b1"].reshape(Hm, 1), ((0, Hmp - Hm), (0, 0))).astype(f32)
    w2 = jnp.pad(P["W2"], ((0, Hmp - Hm), (0, Hmp - Hm))).astype(bf16)
    b2 = jnp.pad(P["b2"].reshape(Hm, 1), ((0, Hmp - Hm), (0, 0))).astype(f32)
    w3 = jnp.pad(P["W3"], ((0, Os - O), (0, Hmp - Hm))).astype(bf16)
    wl = jnp.pad(P["Wl"], ((0, Os - O), (0, 0))).astype(bf16)
    blast = jnp.pad((P["b3"] + P["bl"]).reshape(O, 1),
                    ((0, Os - O), (0, 0))).astype(f32)

    weights = (win_re, win_im, lam_re, lam_im, wz_re, wz_im, wz_x, b1,
               w2, b2, w3, wl, blast)
    w_bytes = sum(int(a.size) * a.dtype.itemsize for a in weights)

    # ---- batch block: >= 2 parallel blocks when B >= 2 (v7x megacore), and
    #      shrunk to a ~40 MiB per-step working set (v7x VMEM is 64 MiB) ----
    if batch_block is not None:
        BB = max(1, min(batch_block, B))
    else:
        BB = max(1, min(8, -(-B // 2)))

    def _vmem_estimate(bb):
        return (2 * bb * H * Lc * 2          # x block, double-buffered (bf16)
                + 2 * bb * Os * Lc * 4       # out block, double-buffered
                + 2 * w_bytes                # weight tiles (pipeline buffers)
                + 10 * bb * Np * Lc * 4      # live scan planes (re/im/rolled)
                + 4 * bb * Hmp * Lc * 4)     # MLP intermediates

    while BB > 1 and _vmem_estimate(BB) > 40 * 1024 * 1024:
        BB //= 2
    B_pad = _round_up(B, BB)

    # ---- activations: time on lanes, bf16 on the wire --------------------
    x_t = jnp.swapaxes(x, 1, 2)                                   # (B, H, L)
    x_t = jnp.pad(x_t, ((0, B_pad - B), (0, 0), (0, L_pad - L))).astype(bf16)

    grid = (B_pad // BB, L_pad // Lc)

    def const_spec(a):
        nd = a.ndim
        return pl.BlockSpec(a.shape, lambda b, l, _nd=nd: (0,) * _nd)

    in_specs = [pl.BlockSpec((BB, H, Lc), lambda b, l: (b, 0, l))]
    in_specs += [const_spec(a) for a in weights]

    out = pl.pallas_call(
        ssm_kernel,
        out_shape=jax.ShapeDtypeStruct((B_pad, Os, L_pad), f32),
        grid_spec=pltpu.PrefetchScalarGridSpec(
            num_scalar_prefetch=0,
            grid=grid,
            in_specs=in_specs,
            out_specs=pl.BlockSpec((BB, Os, Lc), lambda b, l: (b, 0, l)),
            scratch_shapes=[pltpu.VMEM((BB, Np, 1), f32),
                            pltpu.VMEM((BB, Np, 1), f32)]),
        compiler_params=pltpu.CompilerParams(
            dimension_semantics=("parallel", "arbitrary"),
            vmem_limit_bytes=int(min(64 * 1024 * 1024,
                                     max(32 * 1024 * 1024,
                                         2 * _vmem_estimate(BB))))),
    )(x_t, *weights)

    return jnp.swapaxes(out[:B, :O, :L], 1, 2)


def ssm_reference(x, P):
    """Pure-JAX reference matching the PyTorch forward semantics (scan=True)."""
    lam_re, lam_im, gamma = P["lam_re"][0], P["lam_im"][0], P["gamma"][0]
    g_re = gamma * jnp.einsum("blh,nh->bln", x, P["B_re"])
    g_im = gamma * jnp.einsum("blh,nh->bln", x, P["B_im"])

    def step(carry, g):
        h_re, h_im = carry
        gr, gi = g
        nr = lam_re * h_re - lam_im * h_im + gr
        ni = lam_re * h_im + lam_im * h_re + gi
        return (nr, ni), (nr, ni)

    Bb, L, N = g_re.shape
    init = (jnp.zeros((Bb, N), jnp.float32), jnp.zeros((Bb, N), jnp.float32))
    _, (s_re, s_im) = lax.scan(step, init,
                               (jnp.swapaxes(g_re, 0, 1), jnp.swapaxes(g_im, 0, 1)))
    s_re = jnp.swapaxes(s_re, 0, 1)
    s_im = jnp.swapaxes(s_im, 0, 1)

    y = (2.0 * (jnp.einsum("bln,on->blo", s_re, P["C_re"])
                - jnp.einsum("bln,on->blo", s_im, P["C_im"]))
         + jnp.einsum("blh,oh->blo", x, P["D"]))

    z = y @ P["W1"].T + P["b1"]
    z = z * jax.nn.sigmoid(z)
    z = z @ P["W2"].T + P["b2"]
    z = jnp.maximum(z, 0.0)
    z = z @ P["W3"].T + P["b3"]
    return z + x @ P["Wl"].T + P["bl"]


def make_params(key, in_features, out_features, state_features,
                mlp_hidden=30, rmin=0.9, rmax=1.0, max_phase=6.283):
    ks = jax.random.split(key, 16)
    H, O, N, Hm = in_features, out_features, state_features, mlp_hidden

    D = jax.random.normal(ks[0], (O, H), jnp.float32) / math.sqrt(H)
    u1 = jax.random.uniform(ks[1], (N,), jnp.float32)
    u2 = jax.random.uniform(ks[2], (N,), jnp.float32)
    nu_log = jnp.log(-0.5 * jnp.log(u1 * (rmax + rmin) * (rmax - rmin) + rmin ** 2))
    theta_log = jnp.log(max_phase * u2)
    Lambda_mod = jnp.exp(-jnp.exp(nu_log))
    gamma_log = jnp.log(jnp.sqrt(1.0 - Lambda_mod ** 2))

    lam_re = Lambda_mod * jnp.cos(jnp.exp(theta_log))
    lam_im = Lambda_mod * jnp.sin(jnp.exp(theta_log))
    gamma = jnp.exp(gamma_log)

    B_re = jax.random.normal(ks[3], (N, H), jnp.float32) / math.sqrt(2 * H)
    B_im = jax.random.normal(ks[4], (N, H), jnp.float32) / math.sqrt(2 * H)
    C_re = jax.random.normal(ks[5], (O, N), jnp.float32) / math.sqrt(N)
    C_im = jax.random.normal(ks[6], (O, N), jnp.float32) / math.sqrt(N)

    def linear(k, out_dim, in_dim):
        kw, kb = jax.random.split(k)
        bound = 1.0 / math.sqrt(in_dim)
        W = jax.random.uniform(kw, (out_dim, in_dim), jnp.float32, -bound, bound)
        b = jax.random.uniform(kb, (out_dim,), jnp.float32, -bound, bound)
        return W, b

    W1, b1 = linear(ks[7], Hm, O)
    W2, b2 = linear(ks[8], Hm, Hm)
    W3, b3 = linear(ks[9], O, Hm)
    Wl, bl = linear(ks[10], O, H)

    return dict(D=D, B_re=B_re, B_im=B_im, C_re=C_re, C_im=C_im,
                lam_re=lam_re[None, :], lam_im=lam_im[None, :],
                gamma=gamma[None, :],
                W1=W1, b1=b1, W2=W2, b2=b2, W3=W3, b3=b3, Wl=Wl, bl=bl)


if __name__ == "__main__":
    key = jax.random.PRNGKey(0)
    k_param, k_x1, k_x2 = jax.random.split(key, 3)

    in_features, out_features, state_features = 4, 4, 8
    P = make_params(k_param, in_features, out_features, state_features)

    # small demo shape: one 128-lane time chunk, 2-wide parallel batch grid
    x1 = jax.random.normal(k_x1, (2, 16, in_features), jnp.float32)
    ref1 = jax.block_until_ready(ssm_reference(x1, P))
    out1 = jax.block_until_ready(ssm_forward(x1, P))
    assert out1.shape == (2, 16, out_features)
    assert jnp.all(jnp.isfinite(out1))
    assert jnp.allclose(out1, ref1, rtol=5e-2, atol=5e-2), (
        f"max abs diff {float(jnp.max(jnp.abs(out1 - ref1)))}")

    # longer sequence + odd batch: exercises the cross-chunk hidden-state
    # carry (two sequence chunks) and batch padding on the parallel grid axis
    x2 = jax.random.normal(k_x2, (3, 256, in_features), jnp.float32)
    ref2 = jax.block_until_ready(ssm_reference(x2, P))
    out2 = jax.block_until_ready(ssm_forward(x2, P))
    assert jnp.allclose(out2, ref2, rtol=5e-2, atol=5e-2), (
        f"max abs diff {float(jnp.max(jnp.abs(out2 - ref2)))}")

    print("KERNEL_OK")
</pallas_src>

<mosaic_0001>
module attributes {stable_mosaic.version = 11 : i64} {
  func.func @ssm_kernel(%arg0: i32, %arg1: i32, %arg2: memref<1x4x128xbf16, #tpu.memory_space<vmem>>, %arg3: memref<8x4xbf16, #tpu.memory_space<vmem>>, %arg4: memref<8x4xbf16, #tpu.memory_space<vmem>>, %arg5: memref<8x1xf32, #tpu.memory_space<vmem>>, %arg6: memref<8x1xf32, #tpu.memory_space<vmem>>, %arg7: memref<32x8xbf16, #tpu.memory_space<vmem>>, %arg8: memref<32x8xbf16, #tpu.memory_space<vmem>>, %arg9: memref<32x4xbf16, #tpu.memory_space<vmem>>, %arg10: memref<32x1xf32, #tpu.memory_space<vmem>>, %arg11: memref<32x32xbf16, #tpu.memory_space<vmem>>, %arg12: memref<32x1xf32, #tpu.memory_space<vmem>>, %arg13: memref<8x32xbf16, #tpu.memory_space<vmem>>, %arg14: memref<8x4xbf16, #tpu.memory_space<vmem>>, %arg15: memref<8x1xf32, #tpu.memory_space<vmem>>, %arg16: memref<1x8x128xf32, #tpu.memory_space<vmem>>, %arg17: memref<1x8x1xf32, #tpu.memory_space<vmem>>, %arg18: memref<1x8x1xf32, #tpu.memory_space<vmem>>) attributes {dimension_semantics = [#tpu.dimension_semantics<parallel>, #tpu.dimension_semantics<arbitrary>], iteration_bounds = array<i64: 2, 1>, scalar_prefetch = 0 : i64, scratch_operands = 2 : i64, tpu.core_type = #tpu.core_type<tc>, window_params = [{transform_indices = @transform_0, window_bounds = array<i64: 1, 4, 128>}, {pipeline_mode = #tpu.pipeline_mode<synchronous>, transform_indices = @transform_1, window_bounds = array<i64: 8, 4>}, {pipeline_mode = #tpu.pipeline_mode<synchronous>, transform_indices = @transform_2, window_bounds = array<i64: 8, 4>}, {pipeline_mode = #tpu.pipeline_mode<synchronous>, transform_indices = @transform_3, window_bounds = array<i64: 8, 1>}, {pipeline_mode = #tpu.pipeline_mode<synchronous>, transform_indices = @transform_4, window_bounds = array<i64: 8, 1>}, {pipeline_mode = #tpu.pipeline_mode<synchronous>, transform_indices = @transform_5, window_bounds = array<i64: 32, 8>}, {pipeline_mode = #tpu.pipeline_mode<synchronous>, transform_indices = @transform_6, window_bounds = array<i64: 32, 8>}, {pipeline_mode = #tpu.pipeline_mode<synchronous>, transform_indices = @transform_7, window_bounds = array<i64: 32, 4>}, {pipeline_mode = #tpu.pipeline_mode<synchronous>, transform_indices = @transform_8, window_bounds = array<i64: 32, 1>}, {pipeline_mode = #tpu.pipeline_mode<synchronous>, transform_indices = @transform_9, window_bounds = array<i64: 32, 32>}, {pipeline_mode = #tpu.pipeline_mode<synchronous>, transform_indices = @transform_10, window_bounds = array<i64: 32, 1>}, {pipeline_mode = #tpu.pipeline_mode<synchronous>, transform_indices = @transform_11, window_bounds = array<i64: 8, 32>}, {pipeline_mode = #tpu.pipeline_mode<synchronous>, transform_indices = @transform_12, window_bounds = array<i64: 8, 4>}, {pipeline_mode = #tpu.pipeline_mode<synchronous>, transform_indices = @transform_13, window_bounds = array<i64: 8, 1>}, {transform_indices = @transform_14, window_bounds = array<i64: 1, 8, 128>}]} {
    %c0_i32 = arith.constant 0 : i32
    %0 = arith.cmpi eq, %arg1, %c0_i32 : i32
    %1 = arith.extui %0 : i1 to i32
    %c0_i32_0 = arith.constant 0 : i32
    %2 = arith.cmpi ne, %1, %c0_i32_0 : i32
    scf.if %2 {
      %cst_88 = arith.constant 0.000000e+00 : f32
      %289 = vector.broadcast %cst_88 : f32 to vector<1x8x1xf32>
      %c0_89 = arith.constant 0 : index
      %c0_90 = arith.constant 0 : index
      %c0_91 = arith.constant 0 : index
      %290 = vector.load %arg17[%c0_89, %c0_90, %c0_91] : memref<1x8x1xf32, #tpu.memory_space<vmem>>, vector<1x8x1xf32>
      tpu.vector_store %arg17[%c0_89, %c0_90, %c0_91], %289 {strides = array<i32>} : memref<1x8x1xf32, #tpu.memory_space<vmem>>, vector<1x8x1xf32>,
      %cst_92 = arith.constant 0.000000e+00 : f32
      %291 = vector.broadcast %cst_92 : f32 to vector<1x8x1xf32>
      %c0_93 = arith.constant 0 : index
      %c0_94 = arith.constant 0 : index
      %c0_95 = arith.constant 0 : index
      %292 = vector.load %arg18[%c0_93, %c0_94, %c0_95] : memref<1x8x1xf32, #tpu.memory_space<vmem>>, vector<1x8x1xf32>
      tpu.vector_store %arg18[%c0_93, %c0_94, %c0_95], %291 {strides = array<i32>} : memref<1x8x1xf32, #tpu.memory_space<vmem>>, vector<1x8x1xf32>,
    } else {
    }
    %c0 = arith.constant 0 : index
    %c0_1 = arith.constant 0 : index
    %c0_2 = arith.constant 0 : index
    %3 = vector.load %arg2[%c0, %c0_1, %c0_2] : memref<1x4x128xbf16, #tpu.memory_space<vmem>>, vector<1x4x128xbf16>
    %c0_3 = arith.constant 0 : index
    %c0_4 = arith.constant 0 : index
    %4 = vector.load %arg3[%c0_3, %c0_4] : memref<8x4xbf16, #tpu.memory_space<vmem>>, vector<8x4xbf16>
    %5 = vector.shape_cast %4 : vector<8x4xbf16> to vector<1x8x4xbf16>
    %cst = arith.constant dense<0.000000e+00> : vector<1x8x128xf32>
    %6 = tpu.matmul %5, %3, %cst {dimension_numbers = #tpu.dot_dimension_numbers<[2], [1], [1], [2], [0, 0, 0, 1, 1, 2], [0], [0]>} : vector<1x8x4xbf16>, vector<1x4x128xbf16>, vector<1x8x128xf32> -> vector<1x8x128xf32>
    %c0_5 = arith.constant 0 : index
    %c0_6 = arith.constant 0 : index
    %7 = vector.load %arg4[%c0_5, %c0_6] : memref<8x4xbf16, #tpu.memory_space<vmem>>, vector<8x4xbf16>
    %8 = vector.shape_cast %7 : vector<8x4xbf16> to vector<1x8x4xbf16>
    %cst_7 = arith.constant dense<0.000000e+00> : vector<1x8x128xf32>
    %9 = tpu.matmul %8, %3, %cst_7 {dimension_numbers = #tpu.dot_dimension_numbers<[2], [1], [1], [2], [0, 0, 0, 1, 1, 2], [0], [0]>} : vector<1x8x4xbf16>, vector<1x4x128xbf16>, vector<1x8x128xf32> -> vector<1x8x128xf32>
    %c0_8 = arith.constant 0 : index
    %c0_9 = arith.constant 0 : index
    %10 = vector.load %arg5[%c0_8, %c0_9] : memref<8x1xf32, #tpu.memory_space<vmem>>, vector<8x1xf32>
    %11 = vector.shape_cast %10 : vector<8x1xf32> to vector<1x8x1xf32>
    %c0_10 = arith.constant 0 : index
    %c0_11 = arith.constant 0 : index
    %12 = vector.load %arg6[%c0_10, %c0_11] : memref<8x1xf32, #tpu.memory_space<vmem>>, vector<8x1xf32>
    %13 = vector.shape_cast %12 : vector<8x1xf32> to vector<1x8x1xf32>
    %14 = tpu.iota {dimensions = array<i32: 2>} : vector<1x1x128xi32>
    %c0_12 = arith.constant 0 : index
    %c0_13 = arith.constant 0 : index
    %c0_14 = arith.constant 0 : index
    %15 = vector.load %arg17[%c0_12, %c0_13, %c0_14] : memref<1x8x1xf32, #tpu.memory_space<vmem>>, vector<1x8x1xf32>
    %c0_15 = arith.constant 0 : index
    %c0_16 = arith.constant 0 : index
    %c0_17 = arith.constant 0 : index
    %16 = vector.load %arg18[%c0_15, %c0_16, %c0_17] : memref<1x8x1xf32, #tpu.memory_space<vmem>>, vector<1x8x1xf32>
    %17 = arith.mulf %11, %15 : vector<1x8x1xf32>
    %18 = arith.mulf %13, %16 : vector<1x8x1xf32>
    %19 = arith.subf %17, %18 : vector<1x8x1xf32>
    %20 = arith.mulf %11, %16 : vector<1x8x1xf32>
    %21 = arith.mulf %13, %15 : vector<1x8x1xf32>
    %22 = arith.addf %20, %21 : vector<1x8x1xf32>
    %c0_i32_18 = arith.constant 0 : i32
    %23 = vector.broadcast %c0_i32_18 : i32 to vector<1x1x128xi32>
    %24 = arith.cmpi eq, %14, %23 : vector<1x1x128xi32>
    %25 = arith.extui %24 : vector<1x1x128xi1> to vector<1x1x128xi32>
    %26 = arith.sitofp %25 : vector<1x1x128xi32> to vector<1x1x128xf32>
    %27 = vector.broadcast %19 : vector<1x8x1xf32> to vector<1x8x128xf32>
    %28 = vector.broadcast %26 : vector<1x1x128xf32> to vector<1x8x128xf32>
    %29 = arith.mulf %27, %28 : vector<1x8x128xf32>
    %30 = arith.addf %6, %29 : vector<1x8x128xf32>
    %31 = vector.broadcast %22 : vector<1x8x1xf32> to vector<1x8x128xf32>
    %32 = vector.broadcast %26 : vector<1x1x128xf32> to vector<1x8x128xf32>
    %33 = arith.mulf %31, %32 : vector<1x8x128xf32>
    %34 = arith.addf %9, %33 : vector<1x8x128xf32>
    %c1_i32 = arith.constant 1 : i32
    %35 = vector.broadcast %c1_i32 : i32 to vector<1x1x128xi32>
    %36 = arith.cmpi sge, %14, %35 : vector<1x1x128xi32>
    %c1_i32_19 = arith.constant 1 : i32
    %37 = tpu.dynamic_rotate %30 by %c1_i32_19 dim 2 : vector<1x8x128xf32>, i32 -> vector<1x8x128xf32>
    %cst_20 = arith.constant 0.000000e+00 : f32
    %38 = vector.shape_cast %36 : vector<1x1x128xi1> to vector<1x1x128xi1>
    %39 = vector.broadcast %38 : vector<1x1x128xi1> to vector<1x8x128xi1>
    %40 = vector.broadcast %cst_20 : f32 to vector<1x8x128xf32>
    %41 = arith.select %39, %37, %40 : vector<1x8x128xi1>, vector<1x8x128xf32>
    %c1_i32_21 = arith.constant 1 : i32
    %42 = tpu.dynamic_rotate %34 by %c1_i32_21 dim 2 : vector<1x8x128xf32>, i32 -> vector<1x8x128xf32>
    %cst_22 = arith.constant 0.000000e+00 : f32
    %43 = vector.shape_cast %36 : vector<1x1x128xi1> to vector<1x1x128xi1>
    %44 = vector.broadcast %43 : vector<1x1x128xi1> to vector<1x8x128xi1>
    %45 = vector.broadcast %cst_22 : f32 to vector<1x8x128xf32>
    %46 = arith.select %44, %42, %45 : vector<1x8x128xi1>, vector<1x8x128xf32>
    %47 = vector.broadcast %11 : vector<1x8x1xf32> to vector<1x8x128xf32>
    %48 = arith.mulf %47, %41 : vector<1x8x128xf32>
    %49 = arith.addf %30, %48 : vector<1x8x128xf32>
    %50 = vector.broadcast %13 : vector<1x8x1xf32> to vector<1x8x128xf32>
    %51 = arith.mulf %50, %46 : vector<1x8x128xf32>
    %52 = arith.subf %49, %51 : vector<1x8x128xf32>
    %53 = vector.broadcast %11 : vector<1x8x1xf32> to vector<1x8x128xf32>
    %54 = arith.mulf %53, %46 : vector<1x8x128xf32>
    %55 = arith.addf %34, %54 : vector<1x8x128xf32>
    %56 = vector.broadcast %13 : vector<1x8x1xf32> to vector<1x8x128xf32>
    %57 = arith.mulf %56, %41 : vector<1x8x128xf32>
    %58 = arith.addf %55, %57 : vector<1x8x128xf32>
    %59 = arith.mulf %11, %11 : vector<1x8x1xf32>
    %60 = arith.mulf %13, %13 : vector<1x8x1xf32>
    %61 = arith.subf %59, %60 : vector<1x8x1xf32>
    %cst_23 = arith.constant 2.000000e+00 : f32
    %62 = vector.broadcast %cst_23 : f32 to vector<1x8x1xf32>
    %63 = arith.mulf %62, %11 : vector<1x8x1xf32>
    %64 = arith.mulf %63, %13 : vector<1x8x1xf32>
    %c2_i32 = arith.constant 2 : i32
    %65 = vector.broadcast %c2_i32 : i32 to vector<1x1x128xi32>
    %66 = arith.cmpi sge, %14, %65 : vector<1x1x128xi32>
    %c2_i32_24 = arith.constant 2 : i32
    %67 = tpu.dynamic_rotate %52 by %c2_i32_24 dim 2 : vector<1x8x128xf32>, i32 -> vector<1x8x128xf32>
    %cst_25 = arith.constant 0.000000e+00 : f32
    %68 = vector.shape_cast %66 : vector<1x1x128xi1> to vector<1x1x128xi1>
    %69 = vector.broadcast %68 : vector<1x1x128xi1> to vector<1x8x128xi1>
    %70 = vector.broadcast %cst_25 : f32 to vector<1x8x128xf32>
    %71 = arith.select %69, %67, %70 : vector<1x8x128xi1>, vector<1x8x128xf32>
    %c2_i32_26 = arith.constant 2 : i32
    %72 = tpu.dynamic_rotate %58 by %c2_i32_26 dim 2 : vector<1x8x128xf32>, i32 -> vector<1x8x128xf32>
    %cst_27 = arith.constant 0.000000e+00 : f32
    %73 = vector.shape_cast %66 : vector<1x1x128xi1> to vector<1x1x128xi1>
    %74 = vector.broadcast %73 : vector<1x1x128xi1> to vector<1x8x128xi1>
    %75 = vector.broadcast %cst_27 : f32 to vector<1x8x128xf32>
    %76 = arith.select %74, %72, %75 : vector<1x8x128xi1>, vector<1x8x128xf32>
    %77 = vector.broadcast %61 : vector<1x8x1xf32> to vector<1x8x128xf32>
    %78 = arith.mulf %77, %71 : vector<1x8x128xf32>
    %79 = arith.addf %52, %78 : vector<1x8x128xf32>
    %80 = vector.broadcast %64 : vector<1x8x1xf32> to vector<1x8x128xf32>
    %81 = arith.mulf %80, %76 : vector<1x8x128xf32>
    %82 = arith.subf %79, %81 : vector<1x8x128xf32>
    %83 = vector.broadcast %61 : vector<1x8x1xf32> to vector<1x8x128xf32>
    %84 = arith.mulf %83, %76 : vector<1x8x128xf32>
    %85 = arith.addf %58, %84 : vector<1x8x128xf32>
    %86 = vector.broadcast %64 : vector<1x8x1xf32> to vector<1x8x128xf32>
    %87 = arith.mulf %86, %71 : vector<1x8x128xf32>
    %88 = arith.addf %85, %87 : vector<1x8x128xf32>
    %89 = arith.mulf %61, %61 : vector<1x8x1xf32>
    %90 = arith.mulf %64, %64 : vector<1x8x1xf32>
    %91 = arith.subf %89, %90 : vector<1x8x1xf32>
    %cst_28 = arith.constant 2.000000e+00 : f32
    %92 = vector.broadcast %cst_28 : f32 to vector<1x8x1xf32>
    %93 = arith.mulf %92, %61 : vector<1x8x1xf32>
    %94 = arith.mulf %93, %64 : vector<1x8x1xf32>
    %c4_i32 = arith.constant 4 : i32
    %95 = vector.broadcast %c4_i32 : i32 to vector<1x1x128xi32>
    %96 = arith.cmpi sge, %14, %95 : vector<1x1x128xi32>
    %c4_i32_29 = arith.constant 4 : i32
    %97 = tpu.dynamic_rotate %82 by %c4_i32_29 dim 2 : vector<1x8x128xf32>, i32 -> vector<1x8x128xf32>
    %cst_30 = arith.constant 0.000000e+00 : f32
    %98 = vector.shape_cast %96 : vector<1x1x128xi1> to vector<1x1x128xi1>
    %99 = vector.broadcast %98 : vector<1x1x128xi1> to vector<1x8x128xi1>
    %100 = vector.broadcast %cst_30 : f32 to vector<1x8x128xf32>
    %101 = arith.select %99, %97, %100 : vector<1x8x128xi1>, vector<1x8x128xf32>
    %c4_i32_31 = arith.constant 4 : i32
    %102 = tpu.dynamic_rotate %88 by %c4_i32_31 dim 2 : vector<1x8x128xf32>, i32 -> vector<1x8x128xf32>
    %cst_32 = arith.constant 0.000000e+00 : f32
    %103 = vector.shape_cast %96 : vector<1x1x128xi1> to vector<1x1x128xi1>
    %104 = vector.broadcast %103 : vector<1x1x128xi1> to vector<1x8x128xi1>
    %105 = vector.broadcast %cst_32 : f32 to vector<1x8x128xf32>
    %106 = arith.select %104, %102, %105 : vector<1x8x128xi1>, vector<1x8x128xf32>
    %107 = vector.broadcast %91 : vector<1x8x1xf32> to vector<1x8x128xf32>
    %108 = arith.mulf %107, %101 : vector<1x8x128xf32>
    %109 = arith.addf %82, %108 : vector<1x8x128xf32>
    %110 = vector.broadcast %94 : vector<1x8x1xf32> to vector<1x8x128xf32>
    %111 = arith.mulf %110, %106 : vector<1x8x128xf32>
    %112 = arith.subf %109, %111 : vector<1x8x128xf32>
    %113 = vector.broadcast %91 : vector<1x8x1xf32> to vector<1x8x128xf32>
    %114 = arith.mulf %113, %106 : vector<1x8x128xf32>
    %115 = arith.addf %88, %114 : vector<1x8x128xf32>
    %116 = vector.broadcast %94 : vector<1x8x1xf32> to vector<1x8x128xf32>
    %117 = arith.mulf %116, %101 : vector<1x8x128xf32>
    %118 = arith.addf %115, %117 : vector<1x8x128xf32>
    %119 = arith.mulf %91, %91 : vector<1x8x1xf32>
    %120 = arith.mulf %94, %94 : vector<1x8x1xf32>
    %121 = arith.subf %119, %120 : vector<1x8x1xf32>
    %cst_33 = arith.constant 2.000000e+00 : f32
    %122 = vector.broadcast %cst_33 : f32 to vector<1x8x1xf32>
    %123 = arith.mulf %122, %91 : vector<1x8x1xf32>
    %124 = arith.mulf %123, %94 : vector<1x8x1xf32>
    %c8_i32 = arith.constant 8 : i32
    %125 = vector.broadcast %c8_i32 : i32 to vector<1x1x128xi32>
    %126 = arith.cmpi sge, %14, %125 : vector<1x1x128xi32>
    %c8_i32_34 = arith.constant 8 : i32
    %127 = tpu.dynamic_rotate %112 by %c8_i32_34 dim 2 : vector<1x8x128xf32>, i32 -> vector<1x8x128xf32>
    %cst_35 = arith.constant 0.000000e+00 : f32
    %128 = vector.shape_cast %126 : vector<1x1x128xi1> to vector<1x1x128xi1>
    %129 = vector.broadcast %128 : vector<1x1x128xi1> to vector<1x8x128xi1>
    %130 = vector.broadcast %cst_35 : f32 to vector<1x8x128xf32>
    %131 = arith.select %129, %127, %130 : vector<1x8x128xi1>, vector<1x8x128xf32>
    %c8_i32_36 = arith.constant 8 : i32
    %132 = tpu.dynamic_rotate %118 by %c8_i32_36 dim 2 : vector<1x8x128xf32>, i32 -> vector<1x8x128xf32>
    %cst_37 = arith.constant 0.000000e+00 : f32
    %133 = vector.shape_cast %126 : vector<1x1x128xi1> to vector<1x1x128xi1>
    %134 = vector.broadcast %133 : vector<1x1x128xi1> to vector<1x8x128xi1>
    %135 = vector.broadcast %cst_37 : f32 to vector<1x8x128xf32>
    %136 = arith.select %134, %132, %135 : vector<1x8x128xi1>, vector<1x8x128xf32>
    %137 = vector.broadcast %121 : vector<1x8x1xf32> to vector<1x8x128xf32>
    %138 = arith.mulf %137, %131 : vector<1x8x128xf32>
    %139 = arith.addf %112, %138 : vector<1x8x128xf32>
    %140 = vector.broadcast %124 : vector<1x8x1xf32> to vector<1x8x128xf32>
    %141 = arith.mulf %140, %136 : vector<1x8x128xf32>
    %142 = arith.subf %139, %141 : vector<1x8x128xf32>
    %143 = vector.broadcast %121 : vector<1x8x1xf32> to vector<1x8x128xf32>
    %144 = arith.mulf %143, %136 : vector<1x8x128xf32>
    %145 = arith.addf %118, %144 : vector<1x8x128xf32>
    %146 = vector.broadcast %124 : vector<1x8x1xf32> to vector<1x8x128xf32>
    %147 = arith.mulf %146, %131 : vector<1x8x128xf32>
    %148 = arith.addf %145, %147 : vector<1x8x128xf32>
    %149 = arith.mulf %121, %121 : vector<1x8x1xf32>
    %150 = arith.mulf %124, %124 : vector<1x8x1xf32>
    %151 = arith.subf %149, %150 : vector<1x8x1xf32>
    %cst_38 = arith.constant 2.000000e+00 : f32
    %152 = vector.broadcast %cst_38 : f32 to vector<1x8x1xf32>
    %153 = arith.mulf %152, %121 : vector<1x8x1xf32>
    %154 = arith.mulf %153, %124 : vector<1x8x1xf32>
    %c16_i32 = arith.constant 16 : i32
    %155 = vector.broadcast %c16_i32 : i32 to vector<1x1x128xi32>
    %156 = arith.cmpi sge, %14, %155 : vector<1x1x128xi32>
    %c16_i32_39 = arith.constant 16 : i32
    %157 = tpu.dynamic_rotate %142 by %c16_i32_39 dim 2 : vector<1x8x128xf32>, i32 -> vector<1x8x128xf32>
    %cst_40 = arith.constant 0.000000e+00 : f32
    %158 = vector.shape_cast %156 : vector<1x1x128xi1> to vector<1x1x128xi1>
    %159 = vector.broadcast %158 : vector<1x1x128xi1> to vector<1x8x128xi1>
    %160 = vector.broadcast %cst_40 : f32 to vector<1x8x128xf32>
    %161 = arith.select %159, %157, %160 : vector<1x8x128xi1>, vector<1x8x128xf32>
    %c16_i32_41 = arith.constant 16 : i32
    %162 = tpu.dynamic_rotate %148 by %c16_i32_41 dim 2 : vector<1x8x128xf32>, i32 -> vector<1x8x128xf32>
    %cst_42 = arith.constant 0.000000e+00 : f32
    %163 = vector.shape_cast %156 : vector<1x1x128xi1> to vector<1x1x128xi1>
    %164 = vector.broadcast %163 : vector<1x1x128xi1> to vector<1x8x128xi1>
    %165 = vector.broadcast %cst_42 : f32 to vector<1x8x128xf32>
    %166 = arith.select %164, %162, %165 : vector<1x8x128xi1>, vector<1x8x128xf32>
    %167 = vector.broadcast %151 : vector<1x8x1xf32> to vector<1x8x128xf32>
    %168 = arith.mulf %167, %161 : vector<1x8x128xf32>
    %169 = arith.addf %142, %168 : vector<1x8x128xf32>
    %170 = vector.broadcast %154 : vector<1x8x1xf32> to vector<1x8x128xf32>
    %171 = arith.mulf %170, %166 : vector<1x8x128xf32>
    %172 = arith.subf %169, %171 : vector<1x8x128xf32>
    %173 = vector.broadcast %151 : vector<1x8x1xf32> to vector<1x8x128xf32>
    %174 = arith.mulf %173, %166 : vector<1x8x128xf32>
    %175 = arith.addf %148, %174 : vector<1x8x128xf32>
    %176 = vector.broadcast %154 : vector<1x8x1xf32> to vector<1x8x128xf32>
    %177 = arith.mulf %176, %161 : vector<1x8x128xf32>
    %178 = arith.addf %175, %177 : vector<1x8x128xf32>
    %179 = arith.mulf %151, %151 : vector<1x8x1xf32>
    %180 = arith.mulf %154, %154 : vector<1x8x1xf32>
    %181 = arith.subf %179, %180 : vector<1x8x1xf32>
    %cst_43 = arith.constant 2.000000e+00 : f32
    %182 = vector.broadcast %cst_43 : f32 to vector<1x8x1xf32>
    %183 = arith.mulf %182, %151 : vector<1x8x1xf32>
    %184 = arith.mulf %183, %154 : vector<1x8x1xf32>
    %c32_i32 = arith.constant 32 : i32
    %185 = vector.broadcast %c32_i32 : i32 to vector<1x1x128xi32>
    %186 = arith.cmpi sge, %14, %185 : vector<1x1x128xi32>
    %c32_i32_44 = arith.constant 32 : i32
    %187 = tpu.dynamic_rotate %172 by %c32_i32_44 dim 2 : vector<1x8x128xf32>, i32 -> vector<1x8x128xf32>
    %cst_45 = arith.constant 0.000000e+00 : f32
    %188 = vector.shape_cast %186 : vector<1x1x128xi1> to vector<1x1x128xi1>
    %189 = vector.broadcast %188 : vector<1x1x128xi1> to vector<1x8x128xi1>
    %190 = vector.broadcast %cst_45 : f32 to vector<1x8x128xf32>
    %191 = arith.select %189, %187, %190 : vector<1x8x128xi1>, vector<1x8x128xf32>
    %c32_i32_46 = arith.constant 32 : i32
    %192 = tpu.dynamic_rotate %178 by %c32_i32_46 dim 2 : vector<1x8x128xf32>, i32 -> vector<1x8x128xf32>
    %cst_47 = arith.constant 0.000000e+00 : f32
    %193 = vector.shape_cast %186 : vector<1x1x128xi1> to vector<1x1x128xi1>
    %194 = vector.broadcast %193 : vector<1x1x128xi1> to vector<1x8x128xi1>
    %195 = vector.broadcast %cst_47 : f32 to vector<1x8x128xf32>
    %196 = arith.select %194, %192, %195 : vector<1x8x128xi1>, vector<1x8x128xf32>
    %197 = vector.broadcast %181 : vector<1x8x1xf32> to vector<1x8x128xf32>
    %198 = arith.mulf %197, %191 : vector<1x8x128xf32>
    %199 = arith.addf %172, %198 : vector<1x8x128xf32>
    %200 = vector.broadcast %184 : vector<1x8x1xf32> to vector<1x8x128xf32>
    %201 = arith.mulf %200, %196 : vector<1x8x128xf32>
    %202 = arith.subf %199, %201 : vector<1x8x128xf32>
    %203 = vector.broadcast %181 : vector<1x8x1xf32> to vector<1x8x128xf32>
    %204 = arith.mulf %203, %196 : vector<1x8x128xf32>
    %205 = arith.addf %178, %204 : vector<1x8x128xf32>
    %206 = vector.broadcast %184 : vector<1x8x1xf32> to vector<1x8x128xf32>
    %207 = arith.mulf %206, %191 : vector<1x8x128xf32>
    %208 = arith.addf %205, %207 : vector<1x8x128xf32>
    %209 = arith.mulf %181, %181 : vector<1x8x1xf32>
    %210 = arith.mulf %184, %184 : vector<1x8x1xf32>
    %211 = arith.subf %209, %210 : vector<1x8x1xf32>
    %cst_48 = arith.constant 2.000000e+00 : f32
    %212 = vector.broadcast %cst_48 : f32 to vector<1x8x1xf32>
    %213 = arith.mulf %212, %181 : vector<1x8x1xf32>
    %214 = arith.mulf %213, %184 : vector<1x8x1xf32>
    %c64_i32 = arith.constant 64 : i32
    %215 = vector.broadcast %c64_i32 : i32 to vector<1x1x128xi32>
    %216 = arith.cmpi sge, %14, %215 : vector<1x1x128xi32>
    %c64_i32_49 = arith.constant 64 : i32
    %217 = tpu.dynamic_rotate %202 by %c64_i32_49 dim 2 : vector<1x8x128xf32>, i32 -> vector<1x8x128xf32>
    %cst_50 = arith.constant 0.000000e+00 : f32
    %218 = vector.shape_cast %216 : vector<1x1x128xi1> to vector<1x1x128xi1>
    %219 = vector.broadcast %218 : vector<1x1x128xi1> to vector<1x8x128xi1>
    %220 = vector.broadcast %cst_50 : f32 to vector<1x8x128xf32>
    %221 = arith.select %219, %217, %220 : vector<1x8x128xi1>, vector<1x8x128xf32>
    %c64_i32_51 = arith.constant 64 : i32
    %222 = tpu.dynamic_rotate %208 by %c64_i32_51 dim 2 : vector<1x8x128xf32>, i32 -> vector<1x8x128xf32>
    %cst_52 = arith.constant 0.000000e+00 : f32
    %223 = vector.shape_cast %216 : vector<1x1x128xi1> to vector<1x1x128xi1>
    %224 = vector.broadcast %223 : vector<1x1x128xi1> to vector<1x8x128xi1>
    %225 = vector.broadcast %cst_52 : f32 to vector<1x8x128xf32>
    %226 = arith.select %224, %222, %225 : vector<1x8x128xi1>, vector<1x8x128xf32>
    %227 = vector.broadcast %211 : vector<1x8x1xf32> to vector<1x8x128xf32>
    %228 = arith.mulf %227, %221 : vector<1x8x128xf32>
    %229 = arith.addf %202, %228 : vector<1x8x128xf32>
    %230 = vector.broadcast %214 : vector<1x8x1xf32> to vector<1x8x128xf32>
    %231 = arith.mulf %230, %226 : vector<1x8x128xf32>
    %232 = arith.subf %229, %231 : vector<1x8x128xf32>
    %233 = vector.broadcast %211 : vector<1x8x1xf32> to vector<1x8x128xf32>
    %234 = arith.mulf %233, %226 : vector<1x8x128xf32>
    %235 = arith.addf %208, %234 : vector<1x8x128xf32>
    %236 = vector.broadcast %214 : vector<1x8x1xf32> to vector<1x8x128xf32>
    %237 = arith.mulf %236, %221 : vector<1x8x128xf32>
    %238 = arith.addf %235, %237 : vector<1x8x128xf32>
    %239 = vector.extract_strided_slice %232 {offsets = [0, 0, 127], sizes = [1, 8, 1], strides = [1, 1, 1]} : vector<1x8x128xf32> to vector<1x8x1xf32>
    %c0_53 = arith.constant 0 : index
    %c0_54 = arith.constant 0 : index
    %c0_55 = arith.constant 0 : index
    %240 = vector.load %arg17[%c0_53, %c0_54, %c0_55] : memref<1x8x1xf32, #tpu.memory_space<vmem>>, vector<1x8x1xf32>
    tpu.vector_store %arg17[%c0_53, %c0_54, %c0_55], %239 {strides = array<i32>} : memref<1x8x1xf32, #tpu.memory_space<vmem>>, vector<1x8x1xf32>,
    %241 = vector.extract_strided_slice %238 {offsets = [0, 0, 127], sizes = [1, 8, 1], strides = [1, 1, 1]} : vector<1x8x128xf32> to vector<1x8x1xf32>
    %c0_56 = arith.constant 0 : index
    %c0_57 = arith.constant 0 : index
    %c0_58 = arith.constant 0 : index
    %242 = vector.load %arg18[%c0_56, %c0_57, %c0_58] : memref<1x8x1xf32, #tpu.memory_space<vmem>>, vector<1x8x1xf32>
    tpu.vector_store %arg18[%c0_56, %c0_57, %c0_58], %241 {strides = array<i32>} : memref<1x8x1xf32, #tpu.memory_space<vmem>>, vector<1x8x1xf32>,
    %243 = arith.truncf %232 : vector<1x8x128xf32> to vector<1x8x128xbf16>
    %244 = arith.truncf %238 : vector<1x8x128xf32> to vector<1x8x128xbf16>
    %c0_59 = arith.constant 0 : index
    %c0_60 = arith.constant 0 : index
    %245 = vector.load %arg7[%c0_59, %c0_60] : memref<32x8xbf16, #tpu.memory_space<vmem>>, vector<32x8xbf16>
    %246 = vector.shape_cast %245 : vector<32x8xbf16> to vector<1x32x8xbf16>
    %cst_61 = arith.constant dense<0.000000e+00> : vector<1x32x128xf32>
    %247 = tpu.matmul %246, %243, %cst_61 {dimension_numbers = #tpu.dot_dimension_numbers<[2], [1], [1], [2], [0, 0, 0, 1, 1, 2], [0], [0]>} : vector<1x32x8xbf16>, vector<1x8x128xbf16>, vector<1x32x128xf32> -> vector<1x32x128xf32>
    %c0_62 = arith.constant 0 : index
    %c0_63 = arith.constant 0 : index
    %248 = vector.load %arg8[%c0_62, %c0_63] : memref<32x8xbf16, #tpu.memory_space<vmem>>, vector<32x8xbf16>
    %249 = vector.shape_cast %248 : vector<32x8xbf16> to vector<1x32x8xbf16>
    %cst_64 = arith.constant dense<0.000000e+00> : vector<1x32x128xf32>
    %250 = tpu.matmul %249, %244, %cst_64 {dimension_numbers = #tpu.dot_dimension_numbers<[2], [1], [1], [2], [0, 0, 0, 1, 1, 2], [0], [0]>} : vector<1x32x8xbf16>, vector<1x8x128xbf16>, vector<1x32x128xf32> -> vector<1x32x128xf32>
    %251 = arith.addf %247, %250 : vector<1x32x128xf32>
    %c0_65 = arith.constant 0 : index
    %c0_66 = arith.constant 0 : index
    %252 = vector.load %arg9[%c0_65, %c0_66] : memref<32x4xbf16, #tpu.memory_space<vmem>>, vector<32x4xbf16>
    %253 = vector.shape_cast %252 : vector<32x4xbf16> to vector<1x32x4xbf16>
    %cst_67 = arith.constant dense<0.000000e+00> : vector<1x32x128xf32>
    %254 = tpu.matmul %253, %3, %cst_67 {dimension_numbers = #tpu.dot_dimension_numbers<[2], [1], [1], [2], [0, 0, 0, 1, 1, 2], [0], [0]>} : vector<1x32x4xbf16>, vector<1x4x128xbf16>, vector<1x32x128xf32> -> vector<1x32x128xf32>
    %255 = arith.addf %251, %254 : vector<1x32x128xf32>
    %c0_68 = arith.constant 0 : index
    %c0_69 = arith.constant 0 : index
    %256 = vector.load %arg10[%c0_68, %c0_69] : memref<32x1xf32, #tpu.memory_space<vmem>>, vector<32x1xf32>
    %257 = vector.shape_cast %256 : vector<32x1xf32> to vector<1x32x1xf32>
    %258 = vector.broadcast %257 : vector<1x32x1xf32> to vector<1x32x128xf32>
    %259 = arith.addf %255, %258 : vector<1x32x128xf32>
    %260 = arith.negf %259 : vector<1x32x128xf32>
    %261 = math.exp %260 : vector<1x32x128xf32>
    %cst_70 = arith.constant 1.000000e+00 : f32
    %262 = vector.broadcast %cst_70 : f32 to vector<1x32x128xf32>
    %263 = arith.addf %262, %261 : vector<1x32x128xf32>
    %264 = arith.divf %262, %263 : vector<1x32x128xf32>
    %265 = arith.mulf %259, %264 : vector<1x32x128xf32>
    %c0_71 = arith.constant 0 : index
    %c0_72 = arith.constant 0 : index
    %266 = vector.load %arg11[%c0_71, %c0_72] : memref<32x32xbf16, #tpu.memory_space<vmem>>, vector<32x32xbf16>
    %267 = arith.truncf %265 : vector<1x32x128xf32> to vector<1x32x128xbf16>
    %268 = vector.shape_cast %266 : vector<32x32xbf16> to vector<1x32x32xbf16>
    %cst_73 = arith.constant dense<0.000000e+00> : vector<1x32x128xf32>
    %269 = tpu.matmul %268, %267, %cst_73 {dimension_numbers = #tpu.dot_dimension_numbers<[2], [1], [1], [2], [0, 0, 0, 1, 1, 2], [0], [0]>} : vector<1x32x32xbf16>, vector<1x32x128xbf16>, vector<1x32x128xf32> -> vector<1x32x128xf32>
    %c0_74 = arith.constant 0 : index
    %c0_75 = arith.constant 0 : index
    %270 = vector.load %arg12[%c0_74, %c0_75] : memref<32x1xf32, #tpu.memory_space<vmem>>, vector<32x1xf32>
    %271 = vector.shape_cast %270 : vector<32x1xf32> to vector<1x32x1xf32>
    %272 = vector.broadcast %271 : vector<1x32x1xf32> to vector<1x32x128xf32>
    %273 = arith.addf %269, %272 : vector<1x32x128xf32>
    %cst_76 = arith.constant 0.000000e+00 : f32
    %274 = vector.broadcast %cst_76 : f32 to vector<1x32x128xf32>
    %275 = arith.maximumf %273, %274 : vector<1x32x128xf32>
    %c0_77 = arith.constant 0 : index
    %c0_78 = arith.constant 0 : index
    %276 = vector.load %arg13[%c0_77, %c0_78] : memref<8x32xbf16, #tpu.memory_space<vmem>>, vector<8x32xbf16>
    %277 = arith.truncf %275 : vector<1x32x128xf32> to vector<1x32x128xbf16>
    %278 = vector.shape_cast %276 : vector<8x32xbf16> to vector<1x8x32xbf16>
    %cst_79 = arith.constant dense<0.000000e+00> : vector<1x8x128xf32>
    %279 = tpu.matmul %278, %277, %cst_79 {dimension_numbers = #tpu.dot_dimension_numbers<[2], [1], [1], [2], [0, 0, 0, 1, 1, 2], [0], [0]>} : vector<1x8x32xbf16>, vector<1x32x128xbf16>, vector<1x8x128xf32> -> vector<1x8x128xf32>
    %c0_80 = arith.constant 0 : index
    %c0_81 = arith.constant 0 : index
    %280 = vector.load %arg14[%c0_80, %c0_81] : memref<8x4xbf16, #tpu.memory_space<vmem>>, vector<8x4xbf16>
    %281 = vector.shape_cast %280 : vector<8x4xbf16> to vector<1x8x4xbf16>
    %cst_82 = arith.constant dense<0.000000e+00> : vector<1x8x128xf32>
    %282 = tpu.matmul %281, %3, %cst_82 {dimension_numbers = #tpu.dot_dimension_numbers<[2], [1], [1], [2], [0, 0, 0, 1, 1, 2], [0], [0]>} : vector<1x8x4xbf16>, vector<1x4x128xbf16>, vector<1x8x128xf32> -> vector<1x8x128xf32>
    %283 = arith.addf %279, %282 : vector<1x8x128xf32>
    %c0_83 = arith.constant 0 : index
    %c0_84 = arith.constant 0 : index
    %284 = vector.load %arg15[%c0_83, %c0_84] : memref<8x1xf32, #tpu.memory_space<vmem>>, vector<8x1xf32>
    %285 = vector.shape_cast %284 : vector<8x1xf32> to vector<1x8x1xf32>
    %286 = vector.broadcast %285 : vector<1x8x1xf32> to vector<1x8x128xf32>
    %287 = arith.addf %283, %286 : vector<1x8x128xf32>
    %c0_85 = arith.constant 0 : index
    %c0_86 = arith.constant 0 : index
    %c0_87 = arith.constant 0 : index
    %288 = vector.load %arg16[%c0_85, %c0_86, %c0_87] : memref<1x8x128xf32, #tpu.memory_space<vmem>>, vector<1x8x128xf32>
    tpu.vector_store %arg16[%c0_85, %c0_86, %c0_87], %287 {strides = array<i32>} : memref<1x8x128xf32, #tpu.memory_space<vmem>>, vector<1x8x128xf32>,
    return
  }
  func.func @transform_0(%arg0: i32, %arg1: i32) -> (i32, i32, i32) {
    %c0_i32 = arith.constant 0 : i32
    %c0_i32_0 = arith.constant 0 : i32
    return %arg0, %c0_i32, %arg1 : i32, i32, i32
  }
  func.func @transform_1(%arg0: i32, %arg1: i32) -> (i32, i32) {
    %c0_i32 = arith.constant 0 : i32
    %c0_i32_0 = arith.constant 0 : i32
    %c0_i32_1 = arith.constant 0 : i32
    return %c0_i32, %c0_i32_0 : i32, i32
  }
  func.func @transform_2(%arg0: i32, %arg1: i32) -> (i32, i32) {
    %c0_i32 = arith.constant 0 : i32
    %c0_i32_0 = arith.constant 0 : i32
    %c0_i32_1 = arith.constant 0 : i32
    return %c0_i32, %c0_i32_0 : i32, i32
  }
  func.func @transform_3(%arg0: i32, %arg1: i32) -> (i32, i32) {
    %c0_i32 = arith.constant 0 : i32
    %c0_i32_0 = arith.constant 0 : i32
    %c0_i32_1 = arith.constant 0 : i32
    return %c0_i32, %c0_i32_0 : i32, i32
  }
  func.func @transform_4(%arg0: i32, %arg1: i32) -> (i32, i32) {
    %c0_i32 = arith.constant 0 : i32
    %c0_i32_0 = arith.constant 0 : i32
    %c0_i32_1 = arith.constant 0 : i32
    return %c0_i32, %c0_i32_0 : i32, i32
  }
  func.func @transform_5(%arg0: i32, %arg1: i32) -> (i32, i32) {
    %c0_i32 = arith.constant 0 : i32
    %c0_i32_0 = arith.constant 0 : i32
    %c0_i32_1 = arith.constant 0 : i32
    return %c0_i32, %c0_i32_0 : i32, i32
  }
  func.func @transform_6(%arg0: i32, %arg1: i32) -> (i32, i32) {
    %c0_i32 = arith.constant 0 : i32
    %c0_i32_0 = arith.constant 0 : i32
    %c0_i32_1 = arith.constant 0 : i32
    return %c0_i32, %c0_i32_0 : i32, i32
  }
  func.func @transform_7(%arg0: i32, %arg1: i32) -> (i32, i32) {
    %c0_i32 = arith.constant 0 : i32
    %c0_i32_0 = arith.constant 0 : i32
    %c0_i32_1 = arith.constant 0 : i32
    return %c0_i32, %c0_i32_0 : i32, i32
  }
  func.func @transform_8(%arg0: i32, %arg1: i32) -> (i32, i32) {
    %c0_i32 = arith.constant 0 : i32
    %c0_i32_0 = arith.constant 0 : i32
    %c0_i32_1 = arith.constant 0 : i32
    return %c0_i32, %c0_i32_0 : i32, i32
  }
  func.func @transform_9(%arg0: i32, %arg1: i32) -> (i32, i32) {
    %c0_i32 = arith.constant 0 : i32
    %c0_i32_0 = arith.constant 0 : i32
    %c0_i32_1 = arith.constant 0 : i32
    return %c0_i32, %c0_i32_0 : i32, i32
  }
  func.func @transform_10(%arg0: i32, %arg1: i32) -> (i32, i32) {
    %c0_i32 = arith.constant 0 : i32
    %c0_i32_0 = arith.constant 0 : i32
    %c0_i32_1 = arith.constant 0 : i32
    return %c0_i32, %c0_i32_0 : i32, i32
  }
  func.func @transform_11(%arg0: i32, %arg1: i32) -> (i32, i32) {
    %c0_i32 = arith.constant 0 : i32
    %c0_i32_0 = arith.constant 0 : i32
    %c0_i32_1 = arith.constant 0 : i32
    return %c0_i32, %c0_i32_0 : i32, i32
  }
  func.func @transform_12(%arg0: i32, %arg1: i32) -> (i32, i32) {
    %c0_i32 = arith.constant 0 : i32
    %c0_i32_0 = arith.constant 0 : i32
    %c0_i32_1 = arith.constant 0 : i32
    return %c0_i32, %c0_i32_0 : i32, i32
  }
  func.func @transform_13(%arg0: i32, %arg1: i32) -> (i32, i32) {
    %c0_i32 = arith.constant 0 : i32
    %c0_i32_0 = arith.constant 0 : i32
    %c0_i32_1 = arith.constant 0 : i32
    return %c0_i32, %c0_i32_0 : i32, i32
  }
  func.func @transform_14(%arg0: i32, %arg1: i32) -> (i32, i32, i32) {
    %c0_i32 = arith.constant 0 : i32
    %c0_i32_0 = arith.constant 0 : i32
    return %arg0, %c0_i32, %arg1 : i32, i32, i32
  }
}

</mosaic_0001>

<llo_original>
// kernel: tpu_custom_call.1
$region0: #{tpu_custom_call.1}
  #allocation0 [shape = 'u32[]', space=smem, size = 0x4, offset = 0x4, fixed_abs, tag = 'smem constant byte address 0x4 - core index']
  #allocation1 [shape = 'u32[144,128]{1,0:T(1,128)}', space=vmem, size = 0x12000, scoped, tag = 'internal scratch']
  #allocation2 [shape = 'f32[1,8,1]{2,1,0:T(8,128)}', space=vmem, size = 0x1000, scoped, tag = 'scratch operand']
  #allocation3 [shape = 'f32[1,8,1]{2,1,0:T(8,128)}', space=vmem, size = 0x1000, scoped, tag = 'scratch operand']
  %s0 = inlined_call_operand.vmem [shape: bf16[2,4,128], index: 0, kind: input, shape index: {}]
  %s1 = inlined_call_operand.vmem [shape: bf16[8,4], index: 1, kind: input, shape index: {}]
  %s2 = inlined_call_operand.vmem [shape: bf16[8,4], index: 2, kind: input, shape index: {}]
  %s3 = inlined_call_operand.vmem [shape: f32[8,1], index: 3, kind: input, shape index: {}]
  %s4 = inlined_call_operand.vmem [shape: f32[8,1], index: 4, kind: input, shape index: {}]
  %s5 = inlined_call_operand.vmem [shape: bf16[32,8], index: 5, kind: input, shape index: {}]
  %s6 = inlined_call_operand.vmem [shape: bf16[32,8], index: 6, kind: input, shape index: {}]
  %s7 = inlined_call_operand.vmem [shape: bf16[32,4], index: 7, kind: input, shape index: {}]
  %s8 = inlined_call_operand.vmem [shape: f32[32,1], index: 8, kind: input, shape index: {}]
  %s9 = inlined_call_operand.vmem [shape: bf16[32,32], index: 9, kind: input, shape index: {}]
  %s10 = inlined_call_operand.vmem [shape: f32[32,1], index: 10, kind: input, shape index: {}]
  %s11 = inlined_call_operand.vmem [shape: bf16[8,32], index: 11, kind: input, shape index: {}]
  %s12 = inlined_call_operand.vmem [shape: bf16[8,4], index: 12, kind: input, shape index: {}]
  %s13 = inlined_call_operand.vmem [shape: f32[8,1], index: 13, kind: input, shape index: {}]
  %s14 = inlined_call_operand.hbm [shape: f32[2,8,128], index: 14, kind: output, shape index: {}]
  %s15 = sld [smem:[#allocation0]]
  $region93: #{tpu_custom_call.1} parent=0
    _
  %s17 = ssub.s32 1, %s15
  %s18 = scalar_select 0, %s17, %s15
  $region1: #{tpu_custom_call.1} parent=0
    #allocation4 [shape = 'u8[8192]{0}', space=vmem, size = 0x2000, scoped, tag = 'output window, operand 0']
    #allocation5 [shape = 's32[2]{0}', space=sflag, size = 0x8, scoped, tag = 'scoped memory for tpu_custom_call.1']
    %19 = vsyncpa [#allocation5], 0
    %s20 = scalar_lea.sflag [#allocation5], 1
    %21 = vsyncpa %s20, 0
    loop: start=0, step=1, limit=4
    $region2: #{tpu_custom_call.1} parent=1 // loop_pre_header
      _
    $region3: #{tpu_custom_call.1} parent=1 // loop_header
      %s23 = sphi 0, %s27
      %p24 = scmp.ge.s32.totalorder %s23, 4
      %s30 = sphi 0, %s42
      %s31 = sphi 0, %s38
      %s32 = sphi 0, %s30
      %s33 = sphi 0, %s31
      %s34 = sphi 0, %s32
      %s35 = sphi 0, %s33
      %s47 = sphi 0, %s49
      %s50 = sphi 0, %s47
      %s51 = sphi 0, %s50
      %s67 = sphi 0, %s51
      %s71 = sphi 0, %s71
      %s73 = sphi 0, %s71
      %s74 = sphi 0, %s73
      %s88 = sphi 0, %s74
      %s92 = sphi 0, %s92
      %s94 = sphi 0, %s92
      %s95 = sphi 0, %s94
      %s109 = sphi 0, %s95
      %s113 = sphi 0, %s113
      %s115 = sphi 0, %s113
      %s116 = sphi 0, %s115
      %s130 = sphi 0, %s116
      %s134 = sphi 0, %s134
      %s136 = sphi 0, %s134
      %s137 = sphi 0, %s136
      %s151 = sphi 0, %s137
      %s155 = sphi 0, %s155
      %s157 = sphi 0, %s155
      %s158 = sphi 0, %s157
      %s172 = sphi 0, %s158
      %s176 = sphi 0, %s176
      %s178 = sphi 0, %s176
      %s179 = sphi 0, %s178
      %s193 = sphi 0, %s179
      %s197 = sphi 0, %s197
      %s199 = sphi 0, %s197
      %s200 = sphi 0, %s199
      %s214 = sphi 0, %s200
      %s218 = sphi 0, %s218
      %s220 = sphi 0, %s218
      %s221 = sphi 0, %s220
      %s235 = sphi 0, %s221
      %s239 = sphi 0, %s239
      %s241 = sphi 0, %s239
      %s242 = sphi 0, %s241
      %s256 = sphi 0, %s242
      %s260 = sphi 0, %s260
      %s262 = sphi 0, %s260
      %s263 = sphi 0, %s262
      %s277 = sphi 0, %s263
      %s281 = sphi 0, %s281
      %s283 = sphi 0, %s281
      %s284 = sphi 0, %s283
      %s298 = sphi 0, %s284
      %s302 = sphi 0, %s302
      %s304 = sphi 0, %s302
      %s305 = sphi 0, %s304
      %s319 = sphi 0, %s305
      %s323 = sphi 0, %s323
      %s325 = sphi 0, %s323
      %s326 = sphi 0, %s325
      %s340 = sphi 0, %s326
      %s348 = sphi 0, %s350
      %s351 = sphi 0, %s348
      %s352 = sphi 0, %s351
      %s368 = sphi 0, %s352
    $region4: #{tpu_custom_call.1} parent=1 // loop_header_branch
      %26 = sbr.rel (%p24) target = $region8
    $region5: #{tpu_custom_call.1} parent=1 // loop_body
      %s28 = ssub.s32 %s23, 1
      %s29 = ssub.s32 %s23, 2
      %s36 = sadd.s32 1, %s31
      %p37 = scmp.ge.s32.totalorder %s36, 1
      %s38 = scalar_select %p37, 0, %s36
      %s39 = sadd.s32 1, %s30
      %s40 = scalar_select %p37, %s39, %s30
      %p41 = scmp.ge.s32.totalorder %s40, 2
      %s42 = scalar_select %p41, 0, %s40
      %s43 = ssub.s32 %s30, %s42
      %s44 = ssub.s32 %s31, %s38
      %s45 = sor.u32 %s43, %s44
      %p46 = scmp.eq.s32.totalorder %s45, 0
      %s48 = sadd.s32 %s47, 1
      %s49 = scalar_select %p46, %s47, %s48
      %p52 = pneg %p46
      %p53 = scmp.eq.s32.totalorder %s23, 1
      %p54 = por %p52, %p53
      %p55 = scmp.ne.s32.totalorder %s47, %s50
      %p56 = scmp.eq.s32.totalorder %s23, 0
      %p57 = por %p55, %p56
      %p58 = scmp.ne.s32.totalorder %s47, %s50
      %p59 = scmp.eq.s32.totalorder %s28, 1
      %p60 = por %p58, %p59
      %p61 = scmp.ne.s32.totalorder %s50, %s51
      %p62 = scmp.eq.s32.totalorder %s28, 0
      %p63 = por %p61, %p62
      %p64 = scmp.ne.s32.totalorder %s50, %s51
      %p65 = scmp.eq.s32.totalorder %s29, 1
      %p66 = por %p64, %p65
      %p68 = scmp.ne.s32.totalorder %s51, %s67
      %p69 = scmp.eq.s32.totalorder %s29, 0
      %p70 = por %p68, %p69
      %s72 = sadd.s32 %s71, 1
      %p75 = scmp.eq.s32.totalorder %s23, 1
      %p76 = scmp.ne.s32.totalorder %s71, %s73
      %p77 = scmp.eq.s32.totalorder %s23, 0
      %p78 = por %p76, %p77
      %p79 = scmp.ne.s32.totalorder %s71, %s73
      %p80 = scmp.eq.s32.totalorder %s28, 1
      %p81 = por %p79, %p80
      %p82 = scmp.ne.s32.totalorder %s73, %s74
      %p83 = scmp.eq.s32.totalorder %s28, 0
      %p84 = por %p82, %p83
      %p85 = scmp.ne.s32.totalorder %s73, %s74
      %p86 = scmp.eq.s32.totalorder %s29, 1
      %p87 = por %p85, %p86
      %p89 = scmp.ne.s32.totalorder %s74, %s88
      %p90 = scmp.eq.s32.totalorder %s29, 0
      %p91 = por %p89, %p90
      %s93 = sadd.s32 %s92, 1
      %p96 = scmp.eq.s32.totalorder %s23, 1
      %p97 = scmp.ne.s32.totalorder %s92, %s94
      %p98 = scmp.eq.s32.totalorder %s23, 0
      %p99 = por %p97, %p98
      %p100 = scmp.ne.s32.totalorder %s92, %s94
      %p101 = scmp.eq.s32.totalorder %s28, 1
      %p102 = por %p100, %p101
      %p103 = scmp.ne.s32.totalorder %s94, %s95
      %p104 = scmp.eq.s32.totalorder %s28, 0
      %p105 = por %p103, %p104
      %p106 = scmp.ne.s32.totalorder %s94, %s95
      %p107 = scmp.eq.s32.totalorder %s29, 1
      %p108 = por %p106, %p107
      %p110 = scmp.ne.s32.totalorder %s95, %s109
      %p111 = scmp.eq.s32.totalorder %s29, 0
      %p112 = por %p110, %p111
      %s114 = sadd.s32 %s113, 1
      %p117 = scmp.eq.s32.totalorder %s23, 1
      %p118 = scmp.ne.s32.totalorder %s113, %s115
      %p119 = scmp.eq.s32.totalorder %s23, 0
      %p120 = por %p118, %p119
      %p121 = scmp.ne.s32.totalorder %s113, %s115
      %p122 = scmp.eq.s32.totalorder %s28, 1
      %p123 = por %p121, %p122
      %p124 = scmp.ne.s32.totalorder %s115, %s116
      %p125 = scmp.eq.s32.totalorder %s28, 0
      %p126 = por %p124, %p125
      %p127 = scmp.ne.s32.totalorder %s115, %s116
      %p128 = scmp.eq.s32.totalorder %s29, 1
      %p129 = por %p127, %p128
      %p131 = scmp.ne.s32.totalorder %s116, %s130
      %p132 = scmp.eq.s32.totalorder %s29, 0
      %p133 = por %p131, %p132
      %s135 = sadd.s32 %s134, 1
      %p138 = scmp.eq.s32.totalorder %s23, 1
      %p139 = scmp.ne.s32.totalorder %s134, %s136
      %p140 = scmp.eq.s32.totalorder %s23, 0
      %p141 = por %p139, %p140
      %p142 = scmp.ne.s32.totalorder %s134, %s136
      %p143 = scmp.eq.s32.totalorder %s28, 1
      %p144 = por %p142, %p143
      %p145 = scmp.ne.s32.totalorder %s136, %s137
      %p146 = scmp.eq.s32.totalorder %s28, 0
      %p147 = por %p145, %p146
      %p148 = scmp.ne.s32.totalorder %s136, %s137
      %p149 = scmp.eq.s32.totalorder %s29, 1
      %p150 = por %p148, %p149
      %p152 = scmp.ne.s32.totalorder %s137, %s151
      %p153 = scmp.eq.s32.totalorder %s29, 0
      %p154 = por %p152, %p153
      %s156 = sadd.s32 %s155, 1
      %p159 = scmp.eq.s32.totalorder %s23, 1
      %p160 = scmp.ne.s32.totalorder %s155, %s157
      %p161 = scmp.eq.s32.totalorder %s23, 0
      %p162 = por %p160, %p161
      %p163 = scmp.ne.s32.totalorder %s155, %s157
      %p164 = scmp.eq.s32.totalorder %s28, 1
      %p165 = por %p163, %p164
      %p166 = scmp.ne.s32.totalorder %s157, %s158
      %p167 = scmp.eq.s32.totalorder %s28, 0
      %p168 = por %p166, %p167
      %p169 = scmp.ne.s32.totalorder %s157, %s158
      %p170 = scmp.eq.s32.totalorder %s29, 1
      %p171 = por %p169, %p170
      %p173 = scmp.ne.s32.totalorder %s158, %s172
      %p174 = scmp.eq.s32.totalorder %s29, 0
      %p175 = por %p173, %p174
      %s177 = sadd.s32 %s176, 1
      %p180 = scmp.eq.s32.totalorder %s23, 1
      %p181 = scmp.ne.s32.totalorder %s176, %s178
      %p182 = scmp.eq.s32.totalorder %s23, 0
      %p183 = por %p181, %p182
      %p184 = scmp.ne.s32.totalorder %s176, %s178
      %p185 = scmp.eq.s32.totalorder %s28, 1
      %p186 = por %p184, %p185
      %p187 = scmp.ne.s32.totalorder %s178, %s179
      %p188 = scmp.eq.s32.totalorder %s28, 0
      %p189 = por %p187, %p188
      %p190 = scmp.ne.s32.totalorder %s178, %s179
      %p191 = scmp.eq.s32.totalorder %s29, 1
      %p192 = por %p190, %p191
      %p194 = scmp.ne.s32.totalorder %s179, %s193
      %p195 = scmp.eq.s32.totalorder %s29, 0
      %p196 = por %p194, %p195
      %s198 = sadd.s32 %s197, 1
      %p201 = scmp.eq.s32.totalorder %s23, 1
      %p202 = scmp.ne.s32.totalorder %s197, %s199
      %p203 = scmp.eq.s32.totalorder %s23, 0
      %p204 = por %p202, %p203
      %p205 = scmp.ne.s32.totalorder %s197, %s199
      %p206 = scmp.eq.s32.totalorder %s28, 1
      %p207 = por %p205, %p206
      %p208 = scmp.ne.s32.totalorder %s199, %s200
      %p209 = scmp.eq.s32.totalorder %s28, 0
      %p210 = por %p208, %p209
      %p211 = scmp.ne.s32.totalorder %s199, %s200
      %p212 = scmp.eq.s32.totalorder %s29, 1
      %p213 = por %p211, %p212
      %p215 = scmp.ne.s32.totalorder %s200, %s214
      %p216 = scmp.eq.s32.totalorder %s29, 0
      %p217 = por %p215, %p216
      %s219 = sadd.s32 %s218, 1
      %p222 = scmp.eq.s32.totalorder %s23, 1
      %p223 = scmp.ne.s32.totalorder %s218, %s220
      %p224 = scmp.eq.s32.totalorder %s23, 0
      %p225 = por %p223, %p224
      %p226 = scmp.ne.s32.totalorder %s218, %s220
      %p227 = scmp.eq.s32.totalorder %s28, 1
      %p228 = por %p226, %p227
      %p229 = scmp.ne.s32.totalorder %s220, %s221
      %p230 = scmp.eq.s32.totalorder %s28, 0
      %p231 = por %p229, %p230
      %p232 = scmp.ne.s32.totalorder %s220, %s221
      %p233 = scmp.eq.s32.totalorder %s29, 1
      %p234 = por %p232, %p233
      %p236 = scmp.ne.s32.totalorder %s221, %s235
      %p237 = scmp.eq.s32.totalorder %s29, 0
      %p238 = por %p236, %p237
      %s240 = sadd.s32 %s239, 1
      %p243 = scmp.eq.s32.totalorder %s23, 1
      %p244 = scmp.ne.s32.totalorder %s239, %s241
      %p245 = scmp.eq.s32.totalorder %s23, 0
      %p246 = por %p244, %p245
      %p247 = scmp.ne.s32.totalorder %s239, %s241
      %p248 = scmp.eq.s32.totalorder %s28, 1
      %p249 = por %p247, %p248
      %p250 = scmp.ne.s32.totalorder %s241, %s242
      %p251 = scmp.eq.s32.totalorder %s28, 0
      %p252 = por %p250, %p251
      %p253 = scmp.ne.s32.totalorder %s241, %s242
      %p254 = scmp.eq.s32.totalorder %s29, 1
      %p255 = por %p253, %p254
      %p257 = scmp.ne.s32.totalorder %s242, %s256
      %p258 = scmp.eq.s32.totalorder %s29, 0
      %p259 = por %p257, %p258
      %s261 = sadd.s32 %s260, 1
      %p264 = scmp.eq.s32.totalorder %s23, 1
      %p265 = scmp.ne.s32.totalorder %s260, %s262
      %p266 = scmp.eq.s32.totalorder %s23, 0
      %p267 = por %p265, %p266
      %p268 = scmp.ne.s32.totalorder %s260, %s262
      %p269 = scmp.eq.s32.totalorder %s28, 1
      %p270 = por %p268, %p269
      %p271 = scmp.ne.s32.totalorder %s262, %s263
      %p272 = scmp.eq.s32.totalorder %s28, 0
      %p273 = por %p271, %p272
      %p274 = scmp.ne.s32.totalorder %s262, %s263
      %p275 = scmp.eq.s32.totalorder %s29, 1
      %p276 = por %p274, %p275
      %p278 = scmp.ne.s32.totalorder %s263, %s277
      %p279 = scmp.eq.s32.totalorder %s29, 0
      %p280 = por %p278, %p279
      %s282 = sadd.s32 %s281, 1
      %p285 = scmp.eq.s32.totalorder %s23, 1
      %p286 = scmp.ne.s32.totalorder %s281, %s283
      %p287 = scmp.eq.s32.totalorder %s23, 0
      %p288 = por %p286, %p287
      %p289 = scmp.ne.s32.totalorder %s281, %s283
      %p290 = scmp.eq.s32.totalorder %s28, 1
      %p291 = por %p289, %p290
      %p292 = scmp.ne.s32.totalorder %s283, %s284
      %p293 = scmp.eq.s32.totalorder %s28, 0
      %p294 = por %p292, %p293
      %p295 = scmp.ne.s32.totalorder %s283, %s284
      %p296 = scmp.eq.s32.totalorder %s29, 1
      %p297 = por %p295, %p296
      %p299 = scmp.ne.s32.totalorder %s284, %s298
      %p300 = scmp.eq.s32.totalorder %s29, 0
      %p301 = por %p299, %p300
      %s303 = sadd.s32 %s302, 1
      %p306 = scmp.eq.s32.totalorder %s23, 1
      %p307 = scmp.ne.s32.totalorder %s302, %s304
      %p308 = scmp.eq.s32.totalorder %s23, 0
      %p309 = por %p307, %p308
      %p310 = scmp.ne.s32.totalorder %s302, %s304
      %p311 = scmp.eq.s32.totalorder %s28, 1
      %p312 = por %p310, %p311
      %p313 = scmp.ne.s32.totalorder %s304, %s305
      %p314 = scmp.eq.s32.totalorder %s28, 0
      %p315 = por %p313, %p314
      %p316 = scmp.ne.s32.totalorder %s304, %s305
      %p317 = scmp.eq.s32.totalorder %s29, 1
      %p318 = por %p316, %p317
      %p320 = scmp.ne.s32.totalorder %s305, %s319
      %p321 = scmp.eq.s32.totalorder %s29, 0
      %p322 = por %p320, %p321
      %s324 = sadd.s32 %s323, 1
      %p327 = scmp.eq.s32.totalorder %s23, 1
      %p328 = scmp.ne.s32.totalorder %s323, %s325
      %p329 = scmp.eq.s32.totalorder %s23, 0
      %p330 = por %p328, %p329
      %p331 = scmp.ne.s32.totalorder %s323, %s325
      %p332 = scmp.eq.s32.totalorder %s28, 1
      %p333 = por %p331, %p332
      %p334 = scmp.ne.s32.totalorder %s325, %s326
      %p335 = scmp.eq.s32.totalorder %s28, 0
      %p336 = por %p334, %p335
      %p337 = scmp.ne.s32.totalorder %s325, %s326
      %p338 = scmp.eq.s32.totalorder %s29, 1
      %p339 = por %p337, %p338
      %p341 = scmp.ne.s32.totalorder %s326, %s340
      %p342 = scmp.eq.s32.totalorder %s29, 0
      %p343 = por %p341, %p342
      %s344 = ssub.s32 %s30, %s42
      %s345 = ssub.s32 %s31, %s38
      %s346 = sor.u32 %s344, %s345
      %p347 = scmp.eq.s32.totalorder %s346, 0
      %s349 = sadd.s32 %s348, 1
      %s350 = scalar_select %p347, %s348, %s349
      %p353 = pneg %p347
      %p354 = scmp.eq.s32.totalorder %s23, 1
      %p355 = por %p353, %p354
      %p356 = scmp.ne.s32.totalorder %s348, %s351
      %p357 = scmp.eq.s32.totalorder %s23, 0
      %p358 = por %p356, %p357
      %p359 = scmp.ne.s32.totalorder %s348, %s351
      %p360 = scmp.eq.s32.totalorder %s28, 1
      %p361 = por %p359, %p360
      %p362 = scmp.ne.s32.totalorder %s351, %s352
      %p363 = scmp.eq.s32.totalorder %s28, 0
      %p364 = por %p362, %p363
      %p365 = scmp.ne.s32.totalorder %s351, %s352
      %p366 = scmp.eq.s32.totalorder %s29, 1
      %p367 = por %p365, %p366
      %p369 = scmp.ne.s32.totalorder %s352, %s368
      %p370 = scmp.eq.s32.totalorder %s29, 0
      %p371 = por %p369, %p370
      %p372 = scmp.le.s32.totalorder 1, %s23
      %p373 = scmp.lt.s32.totalorder %s23, 3
      %p374 = pnand %p372, %p373
      %p375 = pneg %p374
      // Predicated region
      $region9: #{tpu_custom_call.1} parent=5 // pred_check
        _
      $region10: #{tpu_custom_call.1} parent=5 // pred_check_branch
        %377 = sbr.rel (%p374) target = $region12
      $region11: #{tpu_custom_call.1} parent=5 // pred_region
        %s378 = ssub.s32 %s23, 1
        // Predicated region
        $region13: #{tpu_custom_call.1} parent=11 // pred_check
          %p379 = pneg %p84
        $region14: #{tpu_custom_call.1} parent=11 // pred_check_branch
          %381 = sbr.rel (%p379) target = $region16
        $region15: #{tpu_custom_call.1} parent=11 // pred_region
          _
        $region16: #{tpu_custom_call.1} parent=11 // pred_fallthru
          _
        // Predicated region
        $region17: #{tpu_custom_call.1} parent=11 // pred_check
          %p382 = pneg %p105
        $region18: #{tpu_custom_call.1} parent=11 // pred_check_branch
          %384 = sbr.rel (%p382) target = $region20
        $region19: #{tpu_custom_call.1} parent=11 // pred_region
          _
        $region20: #{tpu_custom_call.1} parent=11 // pred_fallthru
          _
        // Predicated region
        $region21: #{tpu_custom_call.1} parent=11 // pred_check
          %p385 = pneg %p126
        $region22: #{tpu_custom_call.1} parent=11 // pred_check_branch
          %387 = sbr.rel (%p385) target = $region24
        $region23: #{tpu_custom_call.1} parent=11 // pred_region
          _
        $region24: #{tpu_custom_call.1} parent=11 // pred_fallthru
          _
        // Predicated region
        $region25: #{tpu_custom_call.1} parent=11 // pred_check
          %p388 = pneg %p147
        $region26: #{tpu_custom_call.1} parent=11 // pred_check_branch
          %390 = sbr.rel (%p388) target = $region28
        $region27: #{tpu_custom_call.1} parent=11 // pred_region
          _
        $region28: #{tpu_custom_call.1} parent=11 // pred_fallthru
          _
        // Predicated region
        $region29: #{tpu_custom_call.1} parent=11 // pred_check
          %p391 = pneg %p168
        $region30: #{tpu_custom_call.1} parent=11 // pred_check_branch
          %393 = sbr.rel (%p391) target = $region32
        $region31: #{tpu_custom_call.1} parent=11 // pred_region
          _
        $region32: #{tpu_custom_call.1} parent=11 // pred_fallthru
          _
        // Predicated region
        $region33: #{tpu_custom_call.1} parent=11 // pred_check
          %p394 = pneg %p189
        $region34: #{tpu_custom_call.1} parent=11 // pred_check_branch
          %396 = sbr.rel (%p394) target = $region36
        $region35: #{tpu_custom_call.1} parent=11 // pred_region
          _
        $region36: #{tpu_custom_call.1} parent=11 // pred_fallthru
          _
        // Predicated region
        $region37: #{tpu_custom_call.1} parent=11 // pred_check
          %p397 = pneg %p210
        $region38: #{tpu_custom_call.1} parent=11 // pred_check_branch
          %399 = sbr.rel (%p397) target = $region40
        $region39: #{tpu_custom_call.1} parent=11 // pred_region
          _
        $region40: #{tpu_custom_call.1} parent=11 // pred_fallthru
          _
        // Predicated region
        $region41: #{tpu_custom_call.1} parent=11 // pred_check
          %p400 = pneg %p231
        $region42: #{tpu_custom_call.1} parent=11 // pred_check_branch
          %402 = sbr.rel (%p400) target = $region44
        $region43: #{tpu_custom_call.1} parent=11 // pred_region
          _
        $region44: #{tpu_custom_call.1} parent=11 // pred_fallthru
          _
        // Predicated region
        $region45: #{tpu_custom_call.1} parent=11 // pred_check
          %p403 = pneg %p252
        $region46: #{tpu_custom_call.1} parent=11 // pred_check_branch
          %405 = sbr.rel (%p403) target = $region48
        $region47: #{tpu_custom_call.1} parent=11 // pred_region
          _
        $region48: #{tpu_custom_call.1} parent=11 // pred_fallthru
          _
        // Predicated region
        $region49: #{tpu_custom_call.1} parent=11 // pred_check
          %p406 = pneg %p273
        $region50: #{tpu_custom_call.1} parent=11 // pred_check_branch
          %408 = sbr.rel (%p406) target = $region52
        $region51: #{tpu_custom_call.1} parent=11 // pred_region
          _
        $region52: #{tpu_custom_call.1} parent=11 // pred_fallthru
          _
        // Predicated region
        $region53: #{tpu_custom_call.1} parent=11 // pred_check
          %p409 = pneg %p294
        $region54: #{tpu_custom_call.1} parent=11 // pred_check_branch
          %411 = sbr.rel (%p409) target = $region56
        $region55: #{tpu_custom_call.1} parent=11 // pred_region
          _
        $region56: #{tpu_custom_call.1} parent=11 // pred_fallthru
          _
        // Predicated region
        $region57: #{tpu_custom_call.1} parent=11 // pred_check
          %p412 = pneg %p315
        $region58: #{tpu_custom_call.1} parent=11 // pred_check_branch
          %414 = sbr.rel (%p412) target = $region60
        $region59: #{tpu_custom_call.1} parent=11 // pred_region
          _
        $region60: #{tpu_custom_call.1} parent=11 // pred_fallthru
          _
        // Predicated region
        $region61: #{tpu_custom_call.1} parent=11 // pred_check
          %p415 = pneg %p336
        $region62: #{tpu_custom_call.1} parent=11 // pred_check_branch
          %417 = sbr.rel (%p415) target = $region64
        $region63: #{tpu_custom_call.1} parent=11 // pred_region
          _
        $region64: #{tpu_custom_call.1} parent=11 // pred_fallthru
          _
      $region12: #{tpu_custom_call.1} parent=5 // pred_fallthru
        _
      %p418 = scmp.lt.s32.totalorder %s23, 2
      // Predicated region
      $region65: #{tpu_custom_call.1} parent=5 // pred_check
        %p419 = pneg %p418
      $region66: #{tpu_custom_call.1} parent=5 // pred_check_branch
        %421 = sbr.rel (%p419) target = $region68
      $region67: #{tpu_custom_call.1} parent=5 // pred_region
        // Predicated region
        $region69: #{tpu_custom_call.1} parent=67 // pred_check
          %p422 = pneg %p57
        $region70: #{tpu_custom_call.1} parent=67 // pred_check_branch
          %424 = sbr.rel (%p422) target = $region72
        $region71: #{tpu_custom_call.1} parent=67 // pred_region
          %p425 = scmp.lt.s32.totalorder %s30, 1
          %s426 = scalar_select %p425, %s30, 1
          %p427 = scmp.lt.s32.totalorder %s31, 0
          %s428 = scalar_select %p427, %s31, 0
          %s429 = sadd.s32 %s428, %s426
          %s430 = smul.addr %s429, 2
          %s431 = scalar_lea.vmem %s0, %s430
        $region72: #{tpu_custom_call.1} parent=67 // pred_fallthru
          _
      $region68: #{tpu_custom_call.1} parent=5 // pred_fallthru
        _
      %p432 = scmp.le.s32.totalorder 1, %s23
      %p433 = scmp.lt.s32.totalorder %s23, 3
      %p434 = pnand %p432, %p433
      %p435 = pneg %p434
      // Predicated region
      $region73: #{tpu_custom_call.1} parent=5 // pred_check
        _
      $region74: #{tpu_custom_call.1} parent=5 // pred_check_branch
        %437 = sbr.rel (%p434) target = $region76
      $region75: #{tpu_custom_call.1} parent=5 // pred_region
        %s438 = ssub.s32 %s23, 1
        %p439 = scmp.lt.s32.totalorder %s32, 1
        %s440 = scalar_select %p439, %s32, 1
        %p441 = scmp.lt.s32.totalorder %s33, 0
        %s442 = scalar_select %p441, %s33, 0
        %s443 = sadd.s32 %s442, %s440
        %s444 = smul.addr %s443, 2
        %s445 = scalar_lea.vmem %s0, %s444
        %p446 = pneg %p63
        %p447 = pneg %p60
        %p448 = pneg %p84
        %p449 = pneg %p81
        %p450 = pneg %p105
        %p451 = pneg %p102
        %p452 = pneg %p126
        %p453 = pneg %p123
        %p454 = pneg %p147
        %p455 = pneg %p144
        %p456 = pneg %p168
        %p457 = pneg %p165
        %p458 = pneg %p189
        %p459 = pneg %p186
        %p460 = pneg %p210
        %p461 = pneg %p207
        %p462 = pneg %p231
        %p463 = pneg %p228
        %p464 = pneg %p252
        %p465 = pneg %p249
        %p466 = pneg %p273
        %p467 = pneg %p270
        %p468 = pneg %p294
        %p469 = pneg %p291
        %p470 = pneg %p315
        %p471 = pneg %p312
        %p472 = pneg %p336
        %p473 = pneg %p333
        %p474 = pneg %p364
        %p475 = pneg %p361
        %s476 = sand.u32 %s351, 1
        %s477 = scalar_lea.sflag [#allocation5], %s476
        %s478 = sand.u32 %s351, 1
        %s479 = smul.addr %s478, 8
        %s480 = scalar_lea.vmem [#allocation4], %s479
        %p481 = scmp.lt.s32.totalorder %s32, 1
        %s482 = scalar_select %p481, %s32, 1
        %p483 = scmp.lt.s32.totalorder %s33, 0
        %s484 = scalar_select %p483, %s33, 0
        %s485 = sadd.s32 %s484, %s482
        %s486 = smul.addr %s485, 2
        %s487 = scalar_lea.vmem %s0, %s486
        %p489 = scmp.eq.s32.totalorder %s33, 0
        // Predicated region
        $region77: #{tpu_custom_call.1} parent=75 // pred_check
          %p490 = pneg %p489
        $region78: #{tpu_custom_call.1} parent=75 // pred_check_branch
          %492 = sbr.rel (%p490) target = $region80
        $region79: #{tpu_custom_call.1} parent=75 // pred_region
          %vm493 = vcmask 7168
          %494 = vst.msk [vmem:[#allocation2] sm:$0xff] %vm493, 0.0
          %495 = vst.msk [vmem:[#allocation3] sm:$0xff] %vm493, 0.0
        $region80: #{tpu_custom_call.1} parent=75 // pred_fallthru
          _
        %v496 = vld [vmem:[%s487] sm:$0x3]
        %v497 = vld [vmem:[%s1] sm:$0xf]
        %v498 = vld [vmem:[%s2] sm:$0xf]
        %v499 = vld [vmem:[%s3] sm:$0xff]
        %v500 = vld [vmem:[%s4] sm:$0xff]
        %v501 = vlaneseq
        %v502 = vand.u32 %v501, 127
        %v503 = vld [vmem:[#allocation2] sm:$0xff]
        %v504 = vld [vmem:[#allocation3] sm:$0xff]
        %v505 = vmul.f32 %v499, %v503
        %v506 = vmul.f32 %v500, %v504
        %v507 = vsub.f32 %v505, %v506
        %v508 = vmul.f32 %v499, %v504
        %v509 = vmul.f32 %v500, %v503
        %v510 = vadd.f32 %v508, %v509
        %vm511 = vcmp.eq.s32.totalorder %v502, 0
        %v512 = vsel %vm511, 1, 0
        %v513 = vcvt.s32.f32 %v512
        %515 = vset.pattern.permute.xlu0 0
        %516 = vperm.xlu0 %515, %v507
        %v517 = vpop.permute.xlu0 %516
        %v519 = vmul.f32 %v517, %v513
        %vm520 = vcmask 31744
        %v522 = vsel %vm520, %v497, 0
        %vm524 = vcmask 1041408
        %v526 = vsel %vm524, %v496, 0
        %528 = vmatprep.subr.bf16.mxu0 0
        %529 = vmatpush1.bf16.msra.mxu0 %v526
        %530 = vmatprep.subr.bf16.mxu0 0
        %531 = vmatpush1.bf16.msra.mxu0 0
        %532 = vmatprep.subr.bf16.mxu0 0
        %533 = vmatpush1.bf16.msra.mxu0 0
        %534 = vmatprep.subr.bf16.mxu0 0
        %535 = vmatpush1.bf16.msra.mxu0 0
        %536 = vmatprep.subr.bf16.mxu0 0
        %537 = vmatpush1.bf16.msra.mxu0 0
        %538 = vmatprep.subr.bf16.mxu0 0
        %539 = vmatpush1.bf16.msra.mxu0 0
        %540 = vmatprep.subr.bf16.mxu0 0
        %541 = vmatpush1.bf16.msra.mxu0 0
        %542 = vmatprep.subr.bf16.mxu0 0
        %543 = vmatpush1.bf16.msra.mxu0 0
        %544 = vmatprep.subr.bf16.mxu0 0
        %545 = vmatpush1.bf16.msra.mxu0 0
        %546 = vmatprep.subr.bf16.mxu0 0
        %547 = vmatpush1.bf16.msra.mxu0 0
        %548 = vmatprep.subr.bf16.mxu0 0
        %549 = vmatpush1.bf16.msra.mxu0 0
        %550 = vmatprep.subr.bf16.mxu0 0
        %551 = vmatpush1.bf16.msra.mxu0 0
        %552 = vmatprep.subr.bf16.mxu0 0
        %553 = vmatpush1.bf16.msra.mxu0 0
        %554 = vmatprep.subr.bf16.mxu0 0
        %555 = vmatpush1.bf16.msra.mxu0 0
        %556 = vmatprep.subr.bf16.mxu0 0
        %557 = vmatpush1.bf16.msra.mxu0 0
        %558 = vmatprep.subr.bf16.mxu0 0
        %559 = vmatpush1.bf16.msra.mxu0 0
        %560 = vmatprep.mubr.bf16.mxu0 0
        %561 = vmatmul.mubr.bf16.gmra.mrb[0].mxu0 %v522
        %v562 = vpop.f32.mrb[0].mxu0
        %v563 = vadd.f32 %v519, %v562
        %v564 = vpop.f32.mrb[0].mxu0
        %v565 = vpop.f32.mrb[0].mxu0
        %v566 = vpop.f32.mrb[0].mxu0
        %567 = vdwg.mxu0
        %569 = vset.pattern.permute.xlu0 0
        %570 = vperm.xlu0 %569, %v510
        %v571 = vpop.permute.xlu0 %570
        %v573 = vmul.f32 %v571, %v513
        %v575 = vsel %vm520, %v498, 0
        %577 = vmatprep.subr.bf16.mxu0 0
        %578 = vmatpush1.bf16.msra.mxu0 %v526
        %579 = vmatprep.subr.bf16.mxu0 0
        %580 = vmatpush1.bf16.msra.mxu0 0
        %581 = vmatprep.subr.bf16.mxu0 0
        %582 = vmatpush1.bf16.msra.mxu0 0
        %583 = vmatprep.subr.bf16.mxu0 0
        %584 = vmatpush1.bf16.msra.mxu0 0
        %585 = vmatprep.subr.bf16.mxu0 0
        %586 = vmatpush1.bf16.msra.mxu0 0
        %587 = vmatprep.subr.bf16.mxu0 0
        %588 = vmatpush1.bf16.msra.mxu0 0
        %589 = vmatprep.subr.bf16.mxu0 0
        %590 = vmatpush1.bf16.msra.mxu0 0
        %591 = vmatprep.subr.bf16.mxu0 0
        %592 = vmatpush1.bf16.msra.mxu0 0
        %593 = vmatprep.subr.bf16.mxu0 0
        %594 = vmatpush1.bf16.msra.mxu0 0
        %595 = vmatprep.subr.bf16.mxu0 0
        %596 = vmatpush1.bf16.msra.mxu0 0
        %597 = vmatprep.subr.bf16.mxu0 0
        %598 = vmatpush1.bf16.msra.mxu0 0
        %599 = vmatprep.subr.bf16.mxu0 0
        %600 = vmatpush1.bf16.msra.mxu0 0
        %601 = vmatprep.subr.bf16.mxu0 0
        %602 = vmatpush1.bf16.msra.mxu0 0
        %603 = vmatprep.subr.bf16.mxu0 0
        %604 = vmatpush1.bf16.msra.mxu0 0
        %605 = vmatprep.subr.bf16.mxu0 0
        %606 = vmatpush1.bf16.msra.mxu0 0
        %607 = vmatprep.subr.bf16.mxu0 0
        %608 = vmatpush1.bf16.msra.mxu0 0
        %609 = vmatprep.mubr.bf16.mxu0 0
        %610 = vmatmul.mubr.bf16.gmra.mrb[0].mxu0 %v575
        %v611 = vpop.f32.mrb[0].mxu0
        %v612 = vadd.f32 %v573, %v611
        %v613 = vpop.f32.mrb[0].mxu0
        %v614 = vpop.f32.mrb[0].mxu0
        %v615 = vpop.f32.mrb[0].mxu0
        %616 = vdwg.mxu0
        %vm617 = vcmp.ge.s32.totalorder %v502, 1
        %618 = vrot.lane.b32.xlu0 %v563, 1
        %v619 = vpop.permute.xlu0 %618
        %v620 = vsel %vm617, 1, 0
        %vm621 = vcmp.eq.s32.totalorder %v620, 1
        %v622 = vsel %vm621, %v619, 0.0
        %623 = vrot.lane.b32.xlu0 %v612, 1
        %v624 = vpop.permute.xlu0 %623
        %v625 = vsel %vm621, %v624, 0.0
        %627 = vset.pattern.permute.xlu0 0
        %628 = vperm.xlu0 %627, %v499
        %v629 = vpop.permute.xlu0 %628
        %v631 = vmul.f32 %v629, %v622
        %v632 = vadd.f32 %v563, %v631
        %634 = vset.pattern.permute.xlu0 0
        %635 = vperm.xlu0 %634, %v500
        %v636 = vpop.permute.xlu0 %635
        %v638 = vmul.f32 %v636, %v625
        %v639 = vsub.f32 %v632, %v638
        %v640 = vmul.f32 %v629, %v625
        %v641 = vadd.f32 %v612, %v640
        %v642 = vmul.f32 %v636, %v622
        %v643 = vadd.f32 %v641, %v642
        %v644 = vmul.f32 %v499, %v499
        %v645 = vmul.f32 %v500, %v500
        %v646 = vsub.f32 %v644, %v645
        %v647 = vmul.f32 %v499, 2.0
        %v648 = vmul.f32 %v647, %v500
        %vm649 = vcmp.ge.s32.totalorder %v502, 2
        %650 = vrot.lane.b32.xlu0 %v639, 2
        %v651 = vpop.permute.xlu0 %650
        %v652 = vsel %vm649, 1, 0
        %vm653 = vcmp.eq.s32.totalorder %v652, 1
        %v654 = vsel %vm653, %v651, 0.0
        %655 = vrot.lane.b32.xlu0 %v643, 2
        %v656 = vpop.permute.xlu0 %655
        %v657 = vsel %vm653, %v656, 0.0
        %659 = vset.pattern.permute.xlu0 0
        %660 = vperm.xlu0 %659, %v646
        %v661 = vpop.permute.xlu0 %660
        %v663 = vmul.f32 %v661, %v654
        %v664 = vadd.f32 %v639, %v663
        %666 = vset.pattern.permute.xlu0 0
        %667 = vperm.xlu0 %666, %v648
        %v668 = vpop.permute.xlu0 %667
        %v670 = vmul.f32 %v668, %v657
        %v671 = vsub.f32 %v664, %v670
        %v672 = vmul.f32 %v661, %v657
        %v673 = vadd.f32 %v643, %v672
        %v674 = vmul.f32 %v668, %v654
        %v675 = vadd.f32 %v673, %v674
        %v676 = vmul.f32 %v646, %v646
        %v677 = vmul.f32 %v648, %v648
        %v678 = vsub.f32 %v676, %v677
        %v679 = vmul.f32 %v646, 2.0
        %v680 = vmul.f32 %v679, %v648
        %vm681 = vcmp.ge.s32.totalorder %v502, 4
        %682 = vrot.lane.b32.xlu0 %v671, 4
        %v683 = vpop.permute.xlu0 %682
        %v684 = vsel %vm681, 1, 0
        %vm685 = vcmp.eq.s32.totalorder %v684, 1
        %v686 = vsel %vm685, %v683, 0.0
        %687 = vrot.lane.b32.xlu0 %v675, 4
        %v688 = vpop.permute.xlu0 %687
        %v689 = vsel %vm685, %v688, 0.0
        %691 = vset.pattern.permute.xlu0 0
        %692 = vperm.xlu0 %691, %v678
        %v693 = vpop.permute.xlu0 %692
        %v695 = vmul.f32 %v693, %v686
        %v696 = vadd.f32 %v671, %v695
        %698 = vset.pattern.permute.xlu0 0
        %699 = vperm.xlu0 %698, %v680
        %v700 = vpop.permute.xlu0 %699
        %v702 = vmul.f32 %v700, %v689
        %v703 = vsub.f32 %v696, %v702
        %v704 = vmul.f32 %v693, %v689
        %v705 = vadd.f32 %v675, %v704
        %v706 = vmul.f32 %v700, %v686
        %v707 = vadd.f32 %v705, %v706
        %v708 = vmul.f32 %v678, %v678
        %v709 = vmul.f32 %v680, %v680
        %v710 = vsub.f32 %v708, %v709
        %v711 = vmul.f32 %v678, 2.0
        %v712 = vmul.f32 %v711, %v680
        %vm713 = vcmp.ge.s32.totalorder %v502, 8
        %714 = vrot.lane.b32.xlu0 %v703, 8
        %v715 = vpop.permute.xlu0 %714
        %v716 = vsel %vm713, 1, 0
        %vm717 = vcmp.eq.s32.totalorder %v716, 1
        %v718 = vsel %vm717, %v715, 0.0
        %719 = vrot.lane.b32.xlu0 %v707, 8
        %v720 = vpop.permute.xlu0 %719
        %v721 = vsel %vm717, %v720, 0.0
        %723 = vset.pattern.permute.xlu0 0
        %724 = vperm.xlu0 %723, %v710
        %v725 = vpop.permute.xlu0 %724
        %v727 = vmul.f32 %v725, %v718
        %v728 = vadd.f32 %v703, %v727
        %730 = vset.pattern.permute.xlu0 0
        %731 = vperm.xlu0 %730, %v712
        %v732 = vpop.permute.xlu0 %731
        %v734 = vmul.f32 %v732, %v721
        %v735 = vsub.f32 %v728, %v734
        %v736 = vmul.f32 %v725, %v721
        %v737 = vadd.f32 %v707, %v736
        %v738 = vmul.f32 %v732, %v718
        %v739 = vadd.f32 %v737, %v738
        %v740 = vmul.f32 %v710, %v710
        %v741 = vmul.f32 %v712, %v712
        %v742 = vsub.f32 %v740, %v741
        %v743 = vmul.f32 %v710, 2.0
        %v744 = vmul.f32 %v743, %v712
        %vm745 = vcmp.ge.s32.totalorder %v502, 16
        %746 = vrot.lane.b32.xlu0 %v735, 16
        %v747 = vpop.permute.xlu0 %746
        %v748 = vsel %vm745, 1, 0
        %vm749 = vcmp.eq.s32.totalorder %v748, 1
        %v750 = vsel %vm749, %v747, 0.0
        %751 = vrot.lane.b32.xlu0 %v739, 16
        %v752 = vpop.permute.xlu0 %751
        %v753 = vsel %vm749, %v752, 0.0
        %755 = vset.pattern.permute.xlu0 0
        %756 = vperm.xlu0 %755, %v742
        %v757 = vpop.permute.xlu0 %756
        %v759 = vmul.f32 %v757, %v750
        %v760 = vadd.f32 %v735, %v759
        %762 = vset.pattern.permute.xlu0 0
        %763 = vperm.xlu0 %762, %v744
        %v764 = vpop.permute.xlu0 %763
        %v766 = vmul.f32 %v764, %v753
        %v767 = vsub.f32 %v760, %v766
        %v768 = vmul.f32 %v757, %v753
        %v769 = vadd.f32 %v739, %v768
        %v770 = vmul.f32 %v764, %v750
        %v771 = vadd.f32 %v769, %v770
        %v772 = vmul.f32 %v742, %v742
        %v773 = vmul.f32 %v744, %v744
        %v774 = vsub.f32 %v772, %v773
        %v775 = vmul.f32 %v742, 2.0
        %v776 = vmul.f32 %v775, %v744
        %vm777 = vcmp.ge.s32.totalorder %v502, 32
        %778 = vrot.lane.b32.xlu0 %v767, 32
        %v779 = vpop.permute.xlu0 %778
        %v780 = vsel %vm777, 1, 0
        %vm781 = vcmp.eq.s32.totalorder %v780, 1
        %v782 = vsel %vm781, %v779, 0.0
        %783 = vrot.lane.b32.xlu0 %v771, 32
        %v784 = vpop.permute.xlu0 %783
        %v785 = vsel %vm781, %v784, 0.0
        %787 = vset.pattern.permute.xlu0 0
        %788 = vperm.xlu0 %787, %v774
        %v789 = vpop.permute.xlu0 %788
        %v791 = vmul.f32 %v789, %v782
        %v792 = vadd.f32 %v767, %v791
        %794 = vset.pattern.permute.xlu0 0
        %795 = vperm.xlu0 %794, %v776
        %v796 = vpop.permute.xlu0 %795
        %v798 = vmul.f32 %v796, %v785
        %v799 = vsub.f32 %v792, %v798
        %v800 = vmul.f32 %v789, %v785
        %v801 = vadd.f32 %v771, %v800
        %v802 = vmul.f32 %v796, %v782
        %v803 = vadd.f32 %v801, %v802
        %v804 = vmul.f32 %v774, %v774
        %v805 = vmul.f32 %v776, %v776
        %v806 = vsub.f32 %v804, %v805
        %v807 = vmul.f32 %v774, 2.0
        %v808 = vmul.f32 %v807, %v776
        %vm809 = vcmp.ge.s32.totalorder %v502, 64
        %810 = vrot.lane.b32.xlu0 %v799, 64
        %v811 = vpop.permute.xlu0 %810
        %v812 = vsel %vm809, 1, 0
        %vm813 = vcmp.eq.s32.totalorder %v812, 1
        %v814 = vsel %vm813, %v811, 0.0
        %815 = vrot.lane.b32.xlu0 %v803, 64
        %v816 = vpop.permute.xlu0 %815
        %v817 = vsel %vm813, %v816, 0.0
        %819 = vset.pattern.permute.xlu0 0
        %820 = vperm.xlu0 %819, %v806
        %v821 = vpop.permute.xlu0 %820
        %v823 = vmul.f32 %v821, %v814
        %v824 = vadd.f32 %v799, %v823
        %826 = vset.pattern.permute.xlu0 0
        %827 = vperm.xlu0 %826, %v808
        %v828 = vpop.permute.xlu0 %827
        %v830 = vmul.f32 %v828, %v817
        %v831 = vsub.f32 %v824, %v830
        %v832 = vmul.f32 %v821, %v817
        %v833 = vadd.f32 %v803, %v832
        %v834 = vmul.f32 %v828, %v814
        %v835 = vadd.f32 %v833, %v834
        %837 = vrot.lane.b32.xlu0 %v831, 1
        %v838 = vpop.permute.xlu0 %837
        %vm840 = vcmask 7168
        %841 = vst.msk [vmem:[#allocation2] sm:$0xff] %vm840, %v838
        %843 = vrot.lane.b32.xlu0 %v835, 1
        %v844 = vpop.permute.xlu0 %843
        %846 = vst.msk [vmem:[#allocation3] sm:$0xff] %vm840, %v844
        %v847 = vpack.c.bf16 %v831, %v831
        %v848 = vpack.c.bf16 %v835, %v835
        %v849 = vld [vmem:[%s5] sm:$0xf]
        %v850 = vld [vmem:[%s5 + $0x4] sm:$0xf]
        %v851 = vld [vmem:[%s5 + $0x8] sm:$0xf]
        %v852 = vld [vmem:[%s5 + $0xc] sm:$0xf]
        %v853 = vld [vmem:[%s6] sm:$0xf]
        %v854 = vld [vmem:[%s6 + $0x4] sm:$0xf]
        %v855 = vld [vmem:[%s6 + $0x8] sm:$0xf]
        %v856 = vld [vmem:[%s6 + $0xc] sm:$0xf]
        %v861 = vunpack.c.l.b16 %v853
        %v862 = vunpack.c.l.b16 %v854
        %v863 = vunpack.c.l.b16 %v855
        %v864 = vunpack.c.l.b16 %v856
        %v865 = vpack.c.b16 %v862, %v861
        %v866 = vpack.c.b16 %v864, %v863
        %vm867 = vcmask 64512
        %v869 = vsel %vm867, %v865, 0
        %v872 = vsel %vm867, %v866, 0
        %vm874 = vcmask 1043456
        %v876 = vsel %vm874, %v848, 0
        %878 = vmatprep.subr.bf16.mxu0 0
        %879 = vmatpush1.bf16.msra.mxu0 %v876
        %880 = vmatprep.subr.bf16.mxu0 0
        %881 = vmatpush1.bf16.msra.mxu0 0
        %882 = vmatprep.subr.bf16.mxu0 0
        %883 = vmatpush1.bf16.msra.mxu0 0
        %884 = vmatprep.subr.bf16.mxu0 0
        %885 = vmatpush1.bf16.msra.mxu0 0
        %886 = vmatprep.subr.bf16.mxu0 0
        %887 = vmatpush1.bf16.msra.mxu0 0
        %888 = vmatprep.subr.bf16.mxu0 0
        %889 = vmatpush1.bf16.msra.mxu0 0
        %890 = vmatprep.subr.bf16.mxu0 0
        %891 = vmatpush1.bf16.msra.mxu0 0
        %892 = vmatprep.subr.bf16.mxu0 0
        %893 = vmatpush1.bf16.msra.mxu0 0
        %894 = vmatprep.subr.bf16.mxu0 0
        %895 = vmatpush1.bf16.msra.mxu0 0
        %896 = vmatprep.subr.bf16.mxu0 0
        %897 = vmatpush1.bf16.msra.mxu0 0
        %898 = vmatprep.subr.bf16.mxu0 0
        %899 = vmatpush1.bf16.msra.mxu0 0
        %900 = vmatprep.subr.bf16.mxu0 0
        %901 = vmatpush1.bf16.msra.mxu0 0
        %902 = vmatprep.subr.bf16.mxu0 0
        %903 = vmatpush1.bf16.msra.mxu0 0
        %904 = vmatprep.subr.bf16.mxu0 0
        %905 = vmatpush1.bf16.msra.mxu0 0
        %906 = vmatprep.subr.bf16.mxu0 0
        %907 = vmatpush1.bf16.msra.mxu0 0
        %908 = vmatprep.subr.bf16.mxu0 0
        %909 = vmatpush1.bf16.msra.mxu0 0
        %910 = vmatprep.mubr.bf16.mxu0 0
        %911 = vmatmul.mubr.bf16.gmra.mrb[0].mxu0 %v869
        %v912 = vpop.f32.mrb[0].mxu0
        %v913 = vadd.f32 0.0, %v912
        %v914 = vpop.f32.mrb[0].mxu0
        %v915 = vpop.f32.mrb[0].mxu0
        %v916 = vadd.f32 0.0, %v915
        %v917 = vpop.f32.mrb[0].mxu0
        %918 = vmatprep.mubr.bf16.mxu0 0
        %919 = vmatmul.mubr.bf16.gmra.mrb[0].mxu0 %v872
        %v920 = vpop.f32.mrb[0].mxu0
        %v921 = vadd.f32 0.0, %v920
        %v922 = vpop.f32.mrb[0].mxu0
        %v923 = vpop.f32.mrb[0].mxu0
        %v924 = vadd.f32 0.0, %v923
        %v925 = vpop.f32.mrb[0].mxu0
        %926 = vdwg.mxu0
        %v931 = vunpack.c.l.b16 %v849
        %v932 = vunpack.c.l.b16 %v850
        %v933 = vunpack.c.l.b16 %v851
        %v934 = vunpack.c.l.b16 %v852
        %v935 = vpack.c.b16 %v932, %v931
        %v936 = vpack.c.b16 %v934, %v933
        %v938 = vsel %vm867, %v935, 0
        %v941 = vsel %vm867, %v936, 0
        %v944 = vsel %vm874, %v847, 0
        %946 = vmatprep.subr.bf16.mxu0 0
        %947 = vmatpush1.bf16.msra.mxu0 %v944
        %948 = vmatprep.subr.bf16.mxu0 0
        %949 = vmatpush1.bf16.msra.mxu0 0
        %950 = vmatprep.subr.bf16.mxu0 0
        %951 = vmatpush1.bf16.msra.mxu0 0
        %952 = vmatprep.subr.bf16.mxu0 0
        %953 = vmatpush1.bf16.msra.mxu0 0
        %954 = vmatprep.subr.bf16.mxu0 0
        %955 = vmatpush1.bf16.msra.mxu0 0
        %956 = vmatprep.subr.bf16.mxu0 0
        %957 = vmatpush1.bf16.msra.mxu0 0
        %958 = vmatprep.subr.bf16.mxu0 0
        %959 = vmatpush1.bf16.msra.mxu0 0
        %960 = vmatprep.subr.bf16.mxu0 0
        %961 = vmatpush1.bf16.msra.mxu0 0
        %962 = vmatprep.subr.bf16.mxu0 0
        %963 = vmatpush1.bf16.msra.mxu0 0
        %964 = vmatprep.subr.bf16.mxu0 0
        %965 = vmatpush1.bf16.msra.mxu0 0
        %966 = vmatprep.subr.bf16.mxu0 0
        %967 = vmatpush1.bf16.msra.mxu0 0
        %968 = vmatprep.subr.bf16.mxu0 0
        %969 = vmatpush1.bf16.msra.mxu0 0
        %970 = vmatprep.subr.bf16.mxu0 0
        %971 = vmatpush1.bf16.msra.mxu0 0
        %972 = vmatprep.subr.bf16.mxu0 0
        %973 = vmatpush1.bf16.msra.mxu0 0
        %974 = vmatprep.subr.bf16.mxu0 0
        %975 = vmatpush1.bf16.msra.mxu0 0
        %976 = vmatprep.subr.bf16.mxu0 0
        %977 = vmatpush1.bf16.msra.mxu0 0
        %978 = vmatprep.mubr.bf16.mxu0 0
        %979 = vmatmul.mubr.bf16.gmra.mrb[0].mxu0 %v938
        %v980 = vpop.f32.mrb[0].mxu0
        %v981 = vadd.f32 %v913, %v980
        %v982 = vpop.f32.mrb[0].mxu0
        %v983 = vpop.f32.mrb[0].mxu0
        %v984 = vadd.f32 %v916, %v983
        %v985 = vpop.f32.mrb[0].mxu0
        %986 = vmatprep.mubr.bf16.mxu0 0
        %987 = vmatmul.mubr.bf16.gmra.mrb[0].mxu0 %v941
        %v988 = vpop.f32.mrb[0].mxu0
        %v989 = vadd.f32 %v921, %v988
        %v990 = vpop.f32.mrb[0].mxu0
        %v991 = vpop.f32.mrb[0].mxu0
        %v992 = vadd.f32 %v924, %v991
        %v993 = vpop.f32.mrb[0].mxu0
        %994 = vdwg.mxu0
        %v995 = vld [vmem:[%s7] sm:$0xf]
        %v996 = vld [vmem:[%s7 + $0x4] sm:$0xf]
        %v997 = vld [vmem:[%s7 + $0x8] sm:$0xf]
        %v998 = vld [vmem:[%s7 + $0xc] sm:$0xf]
        %v1003 = vunpack.c.l.b16 %v995
        %v1004 = vunpack.c.l.b16 %v996
        %v1005 = vunpack.c.l.b16 %v997
        %v1006 = vunpack.c.l.b16 %v998
        %v1007 = vpack.c.b16 %v1004, %v1003
        %v1008 = vpack.c.b16 %v1006, %v1005
        %v1010 = vsel %vm520, %v1007, 0
        %v1013 = vsel %vm520, %v1008, 0
        %1015 = vmatprep.subr.bf16.mxu0 0
        %1016 = vmatpush1.bf16.msra.mxu0 %v526
        %1017 = vmatprep.subr.bf16.mxu0 0
        %1018 = vmatpush1.bf16.msra.mxu0 0
        %1019 = vmatprep.subr.bf16.mxu0 0
        %1020 = vmatpush1.bf16.msra.mxu0 0
        %1021 = vmatprep.subr.bf16.mxu0 0
        %1022 = vmatpush1.bf16.msra.mxu0 0
        %1023 = vmatprep.subr.bf16.mxu0 0
        %1024 = vmatpush1.bf16.msra.mxu0 0
        %1025 = vmatprep.subr.bf16.mxu0 0
        %1026 = vmatpush1.bf16.msra.mxu0 0
        %1027 = vmatprep.subr.bf16.mxu0 0
        %1028 = vmatpush1.bf16.msra.mxu0 0
        %1029 = vmatprep.subr.bf16.mxu0 0
        %1030 = vmatpush1.bf16.msra.mxu0 0
        %1031 = vmatprep.subr.bf16.mxu0 0
        %1032 = vmatpush1.bf16.msra.mxu0 0
        %1033 = vmatprep.subr.bf16.mxu0 0
        %1034 = vmatpush1.bf16.msra.mxu0 0
        %1035 = vmatprep.subr.bf16.mxu0 0
        %1036 = vmatpush1.bf16.msra.mxu0 0
        %1037 = vmatprep.subr.bf16.mxu0 0
        %1038 = vmatpush1.bf16.msra.mxu0 0
        %1039 = vmatprep.subr.bf16.mxu0 0
        %1040 = vmatpush1.bf16.msra.mxu0 0
        %1041 = vmatprep.subr.bf16.mxu0 0
        %1042 = vmatpush1.bf16.msra.mxu0 0
        %1043 = vmatprep.subr.bf16.mxu0 0
        %1044 = vmatpush1.bf16.msra.mxu0 0
        %1045 = vmatprep.subr.bf16.mxu0 0
        %1046 = vmatpush1.bf16.msra.mxu0 0
        %1047 = vmatprep.mubr.bf16.mxu0 0
        %1048 = vmatmul.mubr.bf16.gmra.mrb[0].mxu0 %v1010
        %v1049 = vpop.f32.mrb[0].mxu0
        %v1050 = vadd.f32 0.0, %v1049
        %v1051 = vpop.f32.mrb[0].mxu0
        %v1052 = vpop.f32.mrb[0].mxu0
        %v1053 = vadd.f32 0.0, %v1052
        %v1054 = vpop.f32.mrb[0].mxu0
        %1055 = vmatprep.mubr.bf16.mxu0 0
        %1056 = vmatmul.mubr.bf16.gmra.mrb[0].mxu0 %v1013
        %v1057 = vpop.f32.mrb[0].mxu0
        %v1058 = vadd.f32 0.0, %v1057
        %v1059 = vpop.f32.mrb[0].mxu0
        %v1060 = vpop.f32.mrb[0].mxu0
        %v1061 = vadd.f32 0.0, %v1060
        %v1062 = vpop.f32.mrb[0].mxu0
        %1063 = vdwg.mxu0
        %v1064 = vadd.f32 %v981, %v1050
        %v1065 = vadd.f32 %v984, %v1053
        %v1066 = vadd.f32 %v989, %v1058
        %v1067 = vadd.f32 %v992, %v1061
        %v1068 = vld [vmem:[%s8] sm:$0xff]
        %v1069 = vld [vmem:[%s8 + $0x8] sm:$0xff]
        %v1070 = vld [vmem:[%s8 + $0x10] sm:$0xff]
        %v1071 = vld [vmem:[%s8 + $0x18] sm:$0xff]
        %1073 = vset.pattern.permute.xlu0 0
        %1074 = vperm.xlu0 %1073, %v1068
        %v1075 = vpop.permute.xlu0 %1074
        %1078 = vset.pattern.permute.xlu0 0
        %1079 = vperm.xlu0 %1078, %v1069
        %v1080 = vpop.permute.xlu0 %1079
        %1083 = vset.pattern.permute.xlu0 0
        %1084 = vperm.xlu0 %1083, %v1070
        %v1085 = vpop.permute.xlu0 %1084
        %1088 = vset.pattern.permute.xlu0 0
        %1089 = vperm.xlu0 %1088, %v1071
        %v1090 = vpop.permute.xlu0 %1089
        %v1092 = vadd.f32 %v1064, %v1075
        %v1093 = vadd.f32 %v1065, %v1080
        %v1094 = vadd.f32 %v1066, %v1085
        %v1095 = vadd.f32 %v1067, %v1090
        %v1096 = vxor.u32 %v1092, 2147483648
        %v1097 = vxor.u32 %v1093, 2147483648
        %v1098 = vxor.u32 %v1094, 2147483648
        %v1099 = vxor.u32 %v1095, 2147483648
        %v1100 = vmul.f32 %v1096, 1.442695
        %v1101 = vpow.pop %v1100
        %v1102 = vmul.f32 %v1097, 1.442695
        %v1103 = vpow.pop %v1102
        %v1104 = vmul.f32 %v1098, 1.442695
        %v1105 = vpow.pop %v1104
        %v1106 = vmul.f32 %v1099, 1.442695
        %v1107 = vpow.pop %v1106
        %v1108 = vadd.f32 %v1101, 1.0
        %v1109 = vadd.f32 %v1103, 1.0
        %v1110 = vadd.f32 %v1105, 1.0
        %v1111 = vadd.f32 %v1107, 1.0
        %v1112 = vrcp.pop %v1108
        %v1113 = vmul.f32 1.0, %v1112
        %v1114 = vrcp.pop %v1109
        %v1115 = vmul.f32 1.0, %v1114
        %v1116 = vrcp.pop %v1110
        %v1117 = vmul.f32 1.0, %v1116
        %v1118 = vrcp.pop %v1111
        %v1119 = vmul.f32 1.0, %v1118
        %v1120 = vmul.f32 %v1092, %v1113
        %v1121 = vmul.f32 %v1093, %v1115
        %v1122 = vmul.f32 %v1094, %v1117
        %v1123 = vmul.f32 %v1095, %v1119
        %v1124 = vld [vmem:[%s9] sm:$0xf]
        %v1125 = vld [vmem:[%s9 + $0x4] sm:$0xf]
        %v1126 = vld [vmem:[%s9 + $0x8] sm:$0xf]
        %v1127 = vld [vmem:[%s9 + $0xc] sm:$0xf]
        %v1128 = vpack.c.bf16 %v1121, %v1120
        %v1129 = vpack.c.bf16 %v1123, %v1122
        %v1130 = vld [vmem:[%s10] sm:$0xff]
        %v1131 = vld [vmem:[%s10 + $0x8] sm:$0xff]
        %v1132 = vld [vmem:[%s10 + $0x10] sm:$0xff]
        %v1133 = vld [vmem:[%s10 + $0x18] sm:$0xff]
        %1135 = vset.pattern.permute.xlu0 0
        %1136 = vperm.xlu0 %1135, %v1130
        %v1137 = vpop.permute.xlu0 %1136
        %1140 = vset.pattern.permute.xlu0 0
        %1141 = vperm.xlu0 %1140, %v1131
        %v1142 = vpop.permute.xlu0 %1141
        %1145 = vset.pattern.permute.xlu0 0
        %1146 = vperm.xlu0 %1145, %v1132
        %v1147 = vpop.permute.xlu0 %1146
        %1150 = vset.pattern.permute.xlu0 0
        %1151 = vperm.xlu0 %1150, %v1133
        %v1152 = vpop.permute.xlu0 %1151
        %v1158 = vunpack.c.l.b16 %v1124
        %v1159 = vunpack.c.l.b16 %v1125
        %v1160 = vunpack.c.l.b16 %v1126
        %v1161 = vunpack.c.l.b16 %v1127
        %v1162 = vpack.c.b16 %v1159, %v1158
        %v1163 = vpack.c.b16 %v1161, %v1160
        %vm1164 = vcmask 261120
        %v1166 = vsel %vm1164, %v1162, 0
        %v1169 = vsel %vm1164, %v1163, 0
        %1171 = vmatprep.subr.bf16.mxu0 0
        %1172 = vmatpush1.bf16.msra.mxu0 %v1128
        %1173 = vmatprep.subr.bf16.mxu0 0
        %1174 = vmatpush1.bf16.msra.mxu0 %v1129
        %1175 = vmatprep.subr.bf16.mxu0 0
        %1176 = vmatpush1.bf16.msra.mxu0 0
        %1177 = vmatprep.subr.bf16.mxu0 0
        %1178 = vmatpush1.bf16.msra.mxu0 0
        %1179 = vmatprep.subr.bf16.mxu0 0
        %1180 = vmatpush1.bf16.msra.mxu0 0
        %1181 = vmatprep.subr.bf16.mxu0 0
        %1182 = vmatpush1.bf16.msra.mxu0 0
        %1183 = vmatprep.subr.bf16.mxu0 0
        %1184 = vmatpush1.bf16.msra.mxu0 0
        %1185 = vmatprep.subr.bf16.mxu0 0
        %1186 = vmatpush1.bf16.msra.mxu0 0
        %1187 = vmatprep.subr.bf16.mxu0 0
        %1188 = vmatpush1.bf16.msra.mxu0 0
        %1189 = vmatprep.subr.bf16.mxu0 0
        %1190 = vmatpush1.bf16.msra.mxu0 0
        %1191 = vmatprep.subr.bf16.mxu0 0
        %1192 = vmatpush1.bf16.msra.mxu0 0
        %1193 = vmatprep.subr.bf16.mxu0 0
        %1194 = vmatpush1.bf16.msra.mxu0 0
        %1195 = vmatprep.subr.bf16.mxu0 0
        %1196 = vmatpush1.bf16.msra.mxu0 0
        %1197 = vmatprep.subr.bf16.mxu0 0
        %1198 = vmatpush1.bf16.msra.mxu0 0
        %1199 = vmatprep.subr.bf16.mxu0 0
        %1200 = vmatpush1.bf16.msra.mxu0 0
        %1201 = vmatprep.subr.bf16.mxu0 0
        %1202 = vmatpush1.bf16.msra.mxu0 0
        %1203 = vmatprep.mubr.bf16.mxu0 0
        %1204 = vmatmul.mubr.bf16.gmra.mrb[0].mxu0 %v1166
        %v1205 = vpop.f32.mrb[0].mxu0
        %v1206 = vadd.f32 %v1137, %v1205
        %v1207 = vpop.f32.mrb[0].mxu0
        %v1208 = vpop.f32.mrb[0].mxu0
        %v1209 = vadd.f32 %v1142, %v1208
        %v1210 = vpop.f32.mrb[0].mxu0
        %1211 = vmatprep.mubr.bf16.mxu0 0
        %1212 = vmatmul.mubr.bf16.gmra.mrb[0].mxu0 %v1169
        %v1213 = vpop.f32.mrb[0].mxu0
        %v1214 = vadd.f32 %v1147, %v1213
        %v1215 = vpop.f32.mrb[0].mxu0
        %v1216 = vpop.f32.mrb[0].mxu0
        %v1217 = vadd.f32 %v1152, %v1216
        %v1218 = vpop.f32.mrb[0].mxu0
        %1219 = vdwg.mxu0
        %v1220 = vmax.f32 %v1206, 0.0
        %v1221 = vmax.f32 %v1209, 0.0
        %v1222 = vmax.f32 %v1214, 0.0
        %v1223 = vmax.f32 %v1217, 0.0
        %v1224 = vld [vmem:[%s11] sm:$0xf]
        %v1225 = vpack.c.bf16 %v1221, %v1220
        %v1226 = vpack.c.bf16 %v1223, %v1222
        %v1227 = vld [vmem:[%s12] sm:$0xf]
        %v1229 = vsel %vm520, %v1227, 0
        %1231 = vmatprep.subr.bf16.mxu0 0
        %1232 = vmatpush1.bf16.msra.mxu0 %v526
        %1233 = vmatprep.subr.bf16.mxu0 0
        %1234 = vmatpush1.bf16.msra.mxu0 0
        %1235 = vmatprep.subr.bf16.mxu0 0
        %1236 = vmatpush1.bf16.msra.mxu0 0
        %1237 = vmatprep.subr.bf16.mxu0 0
        %1238 = vmatpush1.bf16.msra.mxu0 0
        %1239 = vmatprep.subr.bf16.mxu0 0
        %1240 = vmatpush1.bf16.msra.mxu0 0
        %1241 = vmatprep.subr.bf16.mxu0 0
        %1242 = vmatpush1.bf16.msra.mxu0 0
        %1243 = vmatprep.subr.bf16.mxu0 0
        %1244 = vmatpush1.bf16.msra.mxu0 0
        %1245 = vmatprep.subr.bf16.mxu0 0
        %1246 = vmatpush1.bf16.msra.mxu0 0
        %1247 = vmatprep.subr.bf16.mxu0 0
        %1248 = vmatpush1.bf16.msra.mxu0 0
        %1249 = vmatprep.subr.bf16.mxu0 0
        %1250 = vmatpush1.bf16.msra.mxu0 0
        %1251 = vmatprep.subr.bf16.mxu0 0
        %1252 = vmatpush1.bf16.msra.mxu0 0
        %1253 = vmatprep.subr.bf16.mxu0 0
        %1254 = vmatpush1.bf16.msra.mxu0 0
        %1255 = vmatprep.subr.bf16.mxu0 0
        %1256 = vmatpush1.bf16.msra.mxu0 0
        %1257 = vmatprep.subr.bf16.mxu0 0
        %1258 = vmatpush1.bf16.msra.mxu0 0
        %1259 = vmatprep.subr.bf16.mxu0 0
        %1260 = vmatpush1.bf16.msra.mxu0 0
        %1261 = vmatprep.subr.bf16.mxu0 0
        %1262 = vmatpush1.bf16.msra.mxu0 0
        %1263 = vmatprep.mubr.bf16.mxu0 0
        %1264 = vmatmul.mubr.bf16.gmra.mrb[0].mxu0 %v1229
        %v1265 = vpop.f32.mrb[0].mxu0
        %v1266 = vadd.f32 0.0, %v1265
        %v1267 = vpop.f32.mrb[0].mxu0
        %v1268 = vpop.f32.mrb[0].mxu0
        %v1269 = vpop.f32.mrb[0].mxu0
        %1270 = vdwg.mxu0
        %v1272 = vsel %vm1164, %v1224, 0
        %1274 = vmatprep.subr.bf16.mxu0 0
        %1275 = vmatpush1.bf16.msra.mxu0 %v1225
        %1276 = vmatprep.subr.bf16.mxu0 0
        %1277 = vmatpush1.bf16.msra.mxu0 %v1226
        %1278 = vmatprep.subr.bf16.mxu0 0
        %1279 = vmatpush1.bf16.msra.mxu0 0
        %1280 = vmatprep.subr.bf16.mxu0 0
        %1281 = vmatpush1.bf16.msra.mxu0 0
        %1282 = vmatprep.subr.bf16.mxu0 0
        %1283 = vmatpush1.bf16.msra.mxu0 0
        %1284 = vmatprep.subr.bf16.mxu0 0
        %1285 = vmatpush1.bf16.msra.mxu0 0
        %1286 = vmatprep.subr.bf16.mxu0 0
        %1287 = vmatpush1.bf16.msra.mxu0 0
        %1288 = vmatprep.subr.bf16.mxu0 0
        %1289 = vmatpush1.bf16.msra.mxu0 0
        %1290 = vmatprep.subr.bf16.mxu0 0
        %1291 = vmatpush1.bf16.msra.mxu0 0
        %1292 = vmatprep.subr.bf16.mxu0 0
        %1293 = vmatpush1.bf16.msra.mxu0 0
        %1294 = vmatprep.subr.bf16.mxu0 0
        %1295 = vmatpush1.bf16.msra.mxu0 0
        %1296 = vmatprep.subr.bf16.mxu0 0
        %1297 = vmatpush1.bf16.msra.mxu0 0
        %1298 = vmatprep.subr.bf16.mxu0 0
        %1299 = vmatpush1.bf16.msra.mxu0 0
        %1300 = vmatprep.subr.bf16.mxu0 0
        %1301 = vmatpush1.bf16.msra.mxu0 0
        %1302 = vmatprep.subr.bf16.mxu0 0
        %1303 = vmatpush1.bf16.msra.mxu0 0
        %1304 = vmatprep.subr.bf16.mxu0 0
        %1305 = vmatpush1.bf16.msra.mxu0 0
        %1306 = vmatprep.mubr.bf16.mxu0 0
        %1307 = vmatmul.mubr.bf16.gmra.mrb[0].mxu0 %v1272
        %v1308 = vpop.f32.mrb[0].mxu0
        %v1309 = vadd.f32 %v1266, %v1308
        %v1310 = vpop.f32.mrb[0].mxu0
        %v1311 = vpop.f32.mrb[0].mxu0
        %v1312 = vpop.f32.mrb[0].mxu0
        %1313 = vdwg.mxu0
        %v1314 = vld [vmem:[%s13] sm:$0xff]
        %1316 = vset.pattern.permute.xlu0 0
        %1317 = vperm.xlu0 %1316, %v1314
        %v1318 = vpop.permute.xlu0 %1317
        %v1320 = vadd.f32 %v1309, %v1318
        %1321 = vst [vmem:[%s480] sm:$0xff] %v1320
        %s1322 = sand.u32 %s351, 1
        %s1323 = scalar_lea.sflag [#allocation5], %s1322
        %s1324 = sand.u32 %s351, 1
        %s1325 = smul.addr %s1324, 8
        %s1326 = scalar_lea.vmem [#allocation4], %s1325
        // Predicated region
        $region81: #{tpu_custom_call.1} parent=75 // pred_check
          %p1327 = pneg %p361
        $region82: #{tpu_custom_call.1} parent=75 // pred_check_branch
          %1329 = sbr.rel (%p1327) target = $region84
        $region83: #{tpu_custom_call.1} parent=75 // pred_region
          %s1331 = ssub.s32 128, 128
          %1332 = vsyncadd %s1323, %s1331
          %s1333 = sadd.s32 %s33, %s32
          %s1334 = smul.addr %s1333, 128
          %s1335 = scalar_lea.hbm %s14, %s1334
          %s1337 = sshll.u32 %s1326, 4
          %s1338 = int_to_ptr.vmem [resolvable:$true] %s1337
          %1340 = dma.vmem_to_hbm [thread:$0]  %s1338, 128, %s1335, %s1323
        $region84: #{tpu_custom_call.1} parent=75 // pred_fallthru
          _
      $region76: #{tpu_custom_call.1} parent=5 // pred_fallthru
        _
      %p1341 = scmp.le.s32.totalorder 2, %s23
      // Predicated region
      $region85: #{tpu_custom_call.1} parent=5 // pred_check
        %p1342 = pneg %p1341
      $region86: #{tpu_custom_call.1} parent=5 // pred_check_branch
        %1344 = sbr.rel (%p1342) target = $region88
      $region87: #{tpu_custom_call.1} parent=5 // pred_region
        %s1345 = ssub.s32 %s23, 2
        // Predicated region
        $region89: #{tpu_custom_call.1} parent=87 // pred_check
          %p1346 = pneg %p367
        $region90: #{tpu_custom_call.1} parent=87 // pred_check_branch
          %1348 = sbr.rel (%p1346) target = $region92
        $region91: #{tpu_custom_call.1} parent=87 // pred_region
          %s1349 = sand.u32 %s352, 1
          %s1350 = scalar_lea.sflag [#allocation5], %s1349
          %s1351 = sand.u32 %s352, 1
          %s1352 = smul.addr %s1351, 8
          %s1353 = scalar_lea.vmem [#allocation4], %s1352
          %1354 = dma.done %s1350, 128
        $region92: #{tpu_custom_call.1} parent=87 // pred_fallthru
          _
      $region88: #{tpu_custom_call.1} parent=5 // pred_fallthru
        _
    $region6: #{tpu_custom_call.1} parent=1 // loop_footer
      %s27 = sadd.s32 1, %s23
    $region7: #{tpu_custom_call.1} parent=1 // loop_footer_branch
      %22 = sbr.rel target = $region3
    $region8: #{tpu_custom_call.1} parent=1 // loop_exit
      _
    %1355 = vsyncpa [#allocation5], 1
    %s1356 = scalar_lea.sflag [#allocation5], 1
    %1357 = vsyncpa %s1356, 1

</llo_original>
